<compile_context>
chip_gen: v5e
topology: v5e:2x2
jax: 0.10.0
libtpu: 0.0.40
codegen_flags: <defaults>
</compile_context>

<pallas_src>
import functools

import jax
import jax.numpy as jnp
from jax.experimental import pallas as pl
from jax.experimental.pallas import tpu as pltpu


_LAYER_DIMS = ((22, 22), (22, 5), (5, 5), (5, 5))  # (fan_in, fan_out) per layer


def _round_up(n, m):
    return ((n + m - 1) // m) * m


def _is_dual_core_chip():
    """True on chips with 2 TensorCores sharing the grid (v7x)."""
    try:
        kind = jax.devices()[0].device_kind.lower()
    except Exception:
        return False
    return "v7" in kind


def _choose_block(B, block_batch):
    """Batch block (lane axis of the output): multiple of 128, capped for VMEM
    and — on dual-TC chips — so the grid keeps >= 4 steps when B allows."""
    full = _round_up(B, 128)
    bblk = max(128, min(_round_up(block_batch, 128), full))
    if _is_dual_core_chip():
        cap = max(128, _round_up(pl.cdiv(B, 4), 128))
        bblk = min(bblk, cap)
    return bblk


# ----------------------------------------------------------------------------
# Kernel
# ----------------------------------------------------------------------------
def net1_kernel(x_ref,
                w1_ref, b1_ref,
                w2_ref, b2_ref,
                w3_ref, b3_ref,
                w4_ref, b4_ref,
                oT_ref):
    """Fused 4-layer MLP on one [bblk, 22] batch block.

    x arrives in natural [batch, feature] layout; layer 1 contracts the feature
    axis of x with axis 1 of W1 (transposed-RHS matmul), producing a lane-dense
    [out, bblk] activation that the remaining layers keep.
    """
    x = x_ref[...]  # f32 [bblk, 22]

    # Layer 1: h^T = W1 @ x^T  (contract x's feature axis with W1's axis 1)
    h = jax.lax.dot_general(
        w1_ref[...], x,
        dimension_numbers=(((1,), (1,)), ((), ())),
        preferred_element_type=jnp.float32)                 # [22, bblk]
    h = jnp.clip(h + b1_ref[...], -1.0, 1.0)                # Hardtanh

    # Layer 2: Linear(22, 5) + Hardtanh
    h = jnp.dot(w2_ref[...], h, preferred_element_type=jnp.float32)
    h = jnp.clip(h + b2_ref[...], -1.0, 1.0)

    # Layer 3: Linear(5, 5) + Hardtanh
    h = jnp.dot(w3_ref[...], h, preferred_element_type=jnp.float32)
    h = jnp.clip(h + b3_ref[...], -1.0, 1.0)

    # Layer 4: Linear(5, 5) (no activation)
    h = jnp.dot(w4_ref[...], h, preferred_element_type=jnp.float32) + b4_ref[...]

    oT_ref[...] = h.astype(oT_ref.dtype)                    # f32 [5, bblk]


# ----------------------------------------------------------------------------
# Reference (pure JAX, exact PyTorch semantics) — also the small-batch fallback
# ----------------------------------------------------------------------------
def net1_reference(x, params):
    h = x
    for i in range(1, 5):
        h = h @ params[f"w{i}"].T + params[f"b{i}"]
        if i < 4:
            h = jnp.clip(h, -1.0, 1.0)   # nn.Hardtanh() default [-1, 1]
    return h


# ----------------------------------------------------------------------------
# Wrapper
# ----------------------------------------------------------------------------
@functools.partial(jax.jit, static_argnames=("block_batch", "min_pallas_batch"))
def net1_forward(x, params, *, block_batch=8192, min_pallas_batch=1024):
    """x: [B, 22] f32. params: w{i}: [out, in], b{i}: [out]. Returns [B, 5] f32."""
    B, F = x.shape
    assert F == 22, F

    # Tiny batches: pallas_call launch + pipeline-prime cost dominates; let XLA
    # fuse the whole thing. Same f32 math as the kernel -> consistent results.
    if B < min_pallas_batch:
        return net1_reference(x, params)

    x = x.astype(jnp.float32)
    ws = [params[f"w{i}"].astype(jnp.float32) for i in range(1, 5)]          # [out, in]
    bs = [params[f"b{i}"].astype(jnp.float32).reshape(-1, 1) for i in range(1, 5)]  # [out, 1]

    bblk = _choose_block(B, block_batch)
    grid = (pl.cdiv(B, bblk),)   # partial tail block handled by Pallas masking

    def batch_block_in(i):       # x: tile the batch (sublane) axis
        return (i, 0)

    def batch_block_out(i):      # output: batch on the lane axis
        return (0, i)

    def resident(i):             # weights/biases: same block every step
        return (0, 0)

    in_specs = [pl.BlockSpec((bblk, 22), batch_block_in)]
    for w, b in zip(ws, bs):
        in_specs.append(pl.BlockSpec(w.shape, resident))
        in_specs.append(pl.BlockSpec(b.shape, resident))

    n_params = sum(fi * fo + fo for fi, fo in _LAYER_DIMS)
    cost = pl.CostEstimate(
        flops=2 * sum(fi * fo for fi, fo in _LAYER_DIMS) * B,
        transcendentals=0,
        bytes_accessed=B * (22 * 4 + 5 * 4) + n_params * 4,
    )

    # Scale the VMEM budget with the block (input block pads 22 -> 128 lanes in
    # VMEM, ~512 B/row/buffer); cap well below v7x's 64 MiB physical VMEM.
    vmem_limit = int(min(48 * 1024 * 1024, bblk * 2048 + (8 << 20)))

    oT = pl.pallas_call(
        net1_kernel,
        out_shape=jax.ShapeDtypeStruct((5, B), jnp.float32),
        grid=grid,
        in_specs=in_specs,
        out_specs=pl.BlockSpec((5, bblk), batch_block_out),
        cost_estimate=cost,
        compiler_params=pltpu.CompilerParams(
            dimension_semantics=("parallel",),   # lets v7x shard over its 2 TCs
            vmem_limit_bytes=vmem_limit),
    )(x, ws[0], bs[0], ws[1], bs[1], ws[2], bs[2], ws[3], bs[3])

    # Tiny [5, B] -> [B, 5] (≈40 B/row); kept out of the kernel so the in-kernel
    # stores stay lane-dense (matters on v5e's single store slot).
    return oT.T


# ----------------------------------------------------------------------------
# Params (nn.Linear-style init, PyTorch [out, in] orientation)
# ----------------------------------------------------------------------------
def init_params(key):
    params = {}
    for idx, (fan_in, fan_out) in enumerate(_LAYER_DIMS, start=1):
        key, kw, kb = jax.random.split(key, 3)
        bound = 1.0 / float(fan_in) ** 0.5
        params[f"w{idx}"] = jax.random.uniform(
            kw, (fan_out, fan_in), jnp.float32, minval=-bound, maxval=bound)
        params[f"b{idx}"] = jax.random.uniform(
            kb, (fan_out,), jnp.float32, minval=-bound, maxval=bound)
    return params


if __name__ == "__main__":
    key = jax.random.PRNGKey(0)
    key, kx1, kx2, kx3 = jax.random.split(key, 4)
    params = init_params(key)

    # Pallas path, single (or per-TC) block.
    x1 = jax.random.normal(kx1, (2048, 22), jnp.float32)
    # Pallas path, multi-step grid with a partial tail block.
    x2 = jax.random.normal(kx2, (1000, 22), jnp.float32)
    # Small-batch XLA fallback path.
    x3 = jax.random.normal(kx3, (8, 22), jnp.float32)

    out1 = jax.block_until_ready(net1_forward(x1, params))
    out2 = jax.block_until_ready(
        net1_forward(x2, params, block_batch=512, min_pallas_batch=128))
    out3 = jax.block_until_ready(net1_forward(x3, params))

    for x, out in ((x1, out1), (x2, out2), (x3, out3)):
        assert out.shape == (x.shape[0], 5), out.shape
        ref = net1_reference(x, params)
        assert jnp.allclose(out, ref, atol=2e-2, rtol=2e-2), \
            "mismatch vs f32 reference"

    print("KERNEL_OK")
</pallas_src>

<mosaic_0001>
module attributes {stable_mosaic.version = 11 : i64} {
  func.func @net1_kernel(%arg0: i32, %arg1: memref<2048x22xf32, #tpu.memory_space<vmem>>, %arg2: memref<22x22xf32, #tpu.memory_space<vmem>>, %arg3: memref<22x1xf32, #tpu.memory_space<vmem>>, %arg4: memref<5x22xf32, #tpu.memory_space<vmem>>, %arg5: memref<5x1xf32, #tpu.memory_space<vmem>>, %arg6: memref<5x5xf32, #tpu.memory_space<vmem>>, %arg7: memref<5x1xf32, #tpu.memory_space<vmem>>, %arg8: memref<5x5xf32, #tpu.memory_space<vmem>>, %arg9: memref<5x1xf32, #tpu.memory_space<vmem>>, %arg10: memref<5x2048xf32, #tpu.memory_space<vmem>>) attributes {dimension_semantics = [#tpu.dimension_semantics<parallel>], iteration_bounds = array<i64: 1>, scalar_prefetch = 0 : i64, scratch_operands = 0 : i64, tpu.core_type = #tpu.core_type<tc>, window_params = [{transform_indices = @transform_0, window_bounds = array<i64: 2048, 22>}, {pipeline_mode = #tpu.pipeline_mode<synchronous>, transform_indices = @transform_1, window_bounds = array<i64: 22, 22>}, {pipeline_mode = #tpu.pipeline_mode<synchronous>, transform_indices = @transform_2, window_bounds = array<i64: 22, 1>}, {pipeline_mode = #tpu.pipeline_mode<synchronous>, transform_indices = @transform_3, window_bounds = array<i64: 5, 22>}, {pipeline_mode = #tpu.pipeline_mode<synchronous>, transform_indices = @transform_4, window_bounds = array<i64: 5, 1>}, {pipeline_mode = #tpu.pipeline_mode<synchronous>, transform_indices = @transform_5, window_bounds = array<i64: 5, 5>}, {pipeline_mode = #tpu.pipeline_mode<synchronous>, transform_indices = @transform_6, window_bounds = array<i64: 5, 1>}, {pipeline_mode = #tpu.pipeline_mode<synchronous>, transform_indices = @transform_7, window_bounds = array<i64: 5, 5>}, {pipeline_mode = #tpu.pipeline_mode<synchronous>, transform_indices = @transform_8, window_bounds = array<i64: 5, 1>}, {transform_indices = @transform_9, window_bounds = array<i64: 5, 2048>}]} {
    %c0 = arith.constant 0 : index
    %c0_0 = arith.constant 0 : index
    %0 = vector.load %arg1[%c0, %c0_0] : memref<2048x22xf32, #tpu.memory_space<vmem>>, vector<2048x22xf32>
    %c0_1 = arith.constant 0 : index
    %c0_2 = arith.constant 0 : index
    %1 = vector.load %arg2[%c0_1, %c0_2] : memref<22x22xf32, #tpu.memory_space<vmem>>, vector<22x22xf32>
    %cst = arith.constant dense<0.000000e+00> : vector<22x2048xf32>
    %2 = tpu.matmul %1, %0, %cst {dimension_numbers = #tpu.dot_dimension_numbers<[1], [1], [0], [0], [0, 0, 1, 0], [], []>} : vector<22x22xf32>, vector<2048x22xf32>, vector<22x2048xf32> -> vector<22x2048xf32>
    %c0_3 = arith.constant 0 : index
    %c0_4 = arith.constant 0 : index
    %3 = vector.load %arg3[%c0_3, %c0_4] : memref<22x1xf32, #tpu.memory_space<vmem>>, vector<22x1xf32>
    %4 = vector.broadcast %3 : vector<22x1xf32> to vector<22x2048xf32>
    %5 = arith.addf %2, %4 : vector<22x2048xf32>
    %cst_5 = arith.constant -1.000000e+00 : f32
    %cst_6 = arith.constant 1.000000e+00 : f32
    %6 = vector.broadcast %cst_5 : f32 to vector<22x2048xf32>
    %7 = arith.maximumf %6, %5 : vector<22x2048xf32>
    %8 = vector.broadcast %cst_6 : f32 to vector<22x2048xf32>
    %9 = arith.minimumf %8, %7 : vector<22x2048xf32>
    %c0_7 = arith.constant 0 : index
    %c0_8 = arith.constant 0 : index
    %10 = vector.load %arg4[%c0_7, %c0_8] : memref<5x22xf32, #tpu.memory_space<vmem>>, vector<5x22xf32>
    %cst_9 = arith.constant dense<0.000000e+00> : vector<5x2048xf32>
    %11 = tpu.matmul %10, %9, %cst_9 {dimension_numbers = #tpu.dot_dimension_numbers<[1], [0], [0], [1], [0, 0, 1, 1], [], []>} : vector<5x22xf32>, vector<22x2048xf32>, vector<5x2048xf32> -> vector<5x2048xf32>
    %c0_10 = arith.constant 0 : index
    %c0_11 = arith.constant 0 : index
    %12 = vector.load %arg5[%c0_10, %c0_11] : memref<5x1xf32, #tpu.memory_space<vmem>>, vector<5x1xf32>
    %13 = vector.broadcast %12 : vector<5x1xf32> to vector<5x2048xf32>
    %14 = arith.addf %11, %13 : vector<5x2048xf32>
    %cst_12 = arith.constant -1.000000e+00 : f32
    %cst_13 = arith.constant 1.000000e+00 : f32
    %15 = vector.broadcast %cst_12 : f32 to vector<5x2048xf32>
    %16 = arith.maximumf %15, %14 : vector<5x2048xf32>
    %17 = vector.broadcast %cst_13 : f32 to vector<5x2048xf32>
    %18 = arith.minimumf %17, %16 : vector<5x2048xf32>
    %c0_14 = arith.constant 0 : index
    %c0_15 = arith.constant 0 : index
    %19 = vector.load %arg6[%c0_14, %c0_15] : memref<5x5xf32, #tpu.memory_space<vmem>>, vector<5x5xf32>
    %cst_16 = arith.constant dense<0.000000e+00> : vector<5x2048xf32>
    %20 = tpu.matmul %19, %18, %cst_16 {dimension_numbers = #tpu.dot_dimension_numbers<[1], [0], [0], [1], [0, 0, 1, 1], [], []>} : vector<5x5xf32>, vector<5x2048xf32>, vector<5x2048xf32> -> vector<5x2048xf32>
    %c0_17 = arith.constant 0 : index
    %c0_18 = arith.constant 0 : index
    %21 = vector.load %arg7[%c0_17, %c0_18] : memref<5x1xf32, #tpu.memory_space<vmem>>, vector<5x1xf32>
    %22 = vector.broadcast %21 : vector<5x1xf32> to vector<5x2048xf32>
    %23 = arith.addf %20, %22 : vector<5x2048xf32>
    %cst_19 = arith.constant -1.000000e+00 : f32
    %cst_20 = arith.constant 1.000000e+00 : f32
    %24 = vector.broadcast %cst_19 : f32 to vector<5x2048xf32>
    %25 = arith.maximumf %24, %23 : vector<5x2048xf32>
    %26 = vector.broadcast %cst_20 : f32 to vector<5x2048xf32>
    %27 = arith.minimumf %26, %25 : vector<5x2048xf32>
    %c0_21 = arith.constant 0 : index
    %c0_22 = arith.constant 0 : index
    %28 = vector.load %arg8[%c0_21, %c0_22] : memref<5x5xf32, #tpu.memory_space<vmem>>, vector<5x5xf32>
    %cst_23 = arith.constant dense<0.000000e+00> : vector<5x2048xf32>
    %29 = tpu.matmul %28, %27, %cst_23 {dimension_numbers = #tpu.dot_dimension_numbers<[1], [0], [0], [1], [0, 0, 1, 1], [], []>} : vector<5x5xf32>, vector<5x2048xf32>, vector<5x2048xf32> -> vector<5x2048xf32>
    %c0_24 = arith.constant 0 : index
    %c0_25 = arith.constant 0 : index
    %30 = vector.load %arg9[%c0_24, %c0_25] : memref<5x1xf32, #tpu.memory_space<vmem>>, vector<5x1xf32>
    %31 = vector.broadcast %30 : vector<5x1xf32> to vector<5x2048xf32>
    %32 = arith.addf %29, %31 : vector<5x2048xf32>
    %c0_26 = arith.constant 0 : index
    %c0_27 = arith.constant 0 : index
    %33 = vector.load %arg10[%c0_26, %c0_27] : memref<5x2048xf32, #tpu.memory_space<vmem>>, vector<5x2048xf32>
    tpu.vector_store %arg10[%c0_26, %c0_27], %32 {strides = array<i32>} : memref<5x2048xf32, #tpu.memory_space<vmem>>, vector<5x2048xf32>,
    return
  }
  func.func @transform_0(%arg0: i32) -> (i32, i32) {
    %c0_i32 = arith.constant 0 : i32
    %c0_i32_0 = arith.constant 0 : i32
    return %arg0, %c0_i32 : i32, i32
  }
  func.func @transform_1(%arg0: i32) -> (i32, i32) {
    %c0_i32 = arith.constant 0 : i32
    %c0_i32_0 = arith.constant 0 : i32
    %c0_i32_1 = arith.constant 0 : i32
    return %c0_i32, %c0_i32_0 : i32, i32
  }
  func.func @transform_2(%arg0: i32) -> (i32, i32) {
    %c0_i32 = arith.constant 0 : i32
    %c0_i32_0 = arith.constant 0 : i32
    %c0_i32_1 = arith.constant 0 : i32
    return %c0_i32, %c0_i32_0 : i32, i32
  }
  func.func @transform_3(%arg0: i32) -> (i32, i32) {
    %c0_i32 = arith.constant 0 : i32
    %c0_i32_0 = arith.constant 0 : i32
    %c0_i32_1 = arith.constant 0 : i32
    return %c0_i32, %c0_i32_0 : i32, i32
  }
  func.func @transform_4(%arg0: i32) -> (i32, i32) {
    %c0_i32 = arith.constant 0 : i32
    %c0_i32_0 = arith.constant 0 : i32
    %c0_i32_1 = arith.constant 0 : i32
    return %c0_i32, %c0_i32_0 : i32, i32
  }
  func.func @transform_5(%arg0: i32) -> (i32, i32) {
    %c0_i32 = arith.constant 0 : i32
    %c0_i32_0 = arith.constant 0 : i32
    %c0_i32_1 = arith.constant 0 : i32
    return %c0_i32, %c0_i32_0 : i32, i32
  }
  func.func @transform_6(%arg0: i32) -> (i32, i32) {
    %c0_i32 = arith.constant 0 : i32
    %c0_i32_0 = arith.constant 0 : i32
    %c0_i32_1 = arith.constant 0 : i32
    return %c0_i32, %c0_i32_0 : i32, i32
  }
  func.func @transform_7(%arg0: i32) -> (i32, i32) {
    %c0_i32 = arith.constant 0 : i32
    %c0_i32_0 = arith.constant 0 : i32
    %c0_i32_1 = arith.constant 0 : i32
    return %c0_i32, %c0_i32_0 : i32, i32
  }
  func.func @transform_8(%arg0: i32) -> (i32, i32) {
    %c0_i32 = arith.constant 0 : i32
    %c0_i32_0 = arith.constant 0 : i32
    %c0_i32_1 = arith.constant 0 : i32
    return %c0_i32, %c0_i32_0 : i32, i32
  }
  func.func @transform_9(%arg0: i32) -> (i32, i32) {
    %c0_i32 = arith.constant 0 : i32
    %c0_i32_0 = arith.constant 0 : i32
    return %c0_i32, %arg0 : i32, i32
  }
}

</mosaic_0001>

<llo_original>
// kernel: net1_forward.1
$region0: #{net1_forward.1}
  #allocation0 [shape = 'u32[]', space=smem, size = 0x4, offset = 0x4, fixed_abs, tag = 'smem constant byte address 0x4 - core index']
  #allocation1 [shape = 'u32[72,128]{1,0:T(1,128)}', space=vmem, size = 0x9000, scoped, tag = 'internal scratch']
  %s0 = inlined_call_operand.vmem [shape: f32[2048,22], index: 0, kind: input, shape index: {}]
  %s1 = inlined_call_operand.vmem [shape: f32[22,22], index: 1, kind: input, shape index: {}]
  %s2 = inlined_call_operand.vmem [shape: f32[22,1], index: 2, kind: input, shape index: {}]
  %s3 = inlined_call_operand.vmem [shape: f32[5,22], index: 3, kind: input, shape index: {}]
  %s4 = inlined_call_operand.vmem [shape: f32[5,1], index: 4, kind: input, shape index: {}]
  %s5 = inlined_call_operand.vmem [shape: f32[5,5], index: 5, kind: input, shape index: {}]
  %s6 = inlined_call_operand.vmem [shape: f32[5,1], index: 6, kind: input, shape index: {}]
  %s7 = inlined_call_operand.vmem [shape: f32[5,5], index: 7, kind: input, shape index: {}]
  %s8 = inlined_call_operand.vmem [shape: f32[5,1], index: 8, kind: input, shape index: {}]
  %s9 = inlined_call_operand.hbm [shape: f32[5,2048], index: 9, kind: output, shape index: {}]
  %s10 = sld [smem:[#allocation0]]
  $region46: #{net1_forward.1} parent=0
    _
  %s12 = ssub.s32 1, %s10
  %s13 = scalar_select 0, %s12, %s10
  $region1: #{net1_forward.1} parent=0
    #allocation2 [shape = 'u8[65536]{0}', space=vmem, size = 0x10000, scoped, tag = 'output window, operand 0, single buffered']
    #allocation3 [shape = 's32[1]{0}', space=sflag, size = 0x4, scoped, tag = 'scoped memory for net1_forward.1']
    %14 = vsyncpa [#allocation3], 0
    // Predicated region
    $region2: #{net1_forward.1} parent=1 // pred_check
      _
    $region3: #{net1_forward.1} parent=1 // pred_check_branch
      %16 = sbr.rel (0) target = $region5
    $region4: #{net1_forward.1} parent=1 // pred_region
      _
    $region5: #{net1_forward.1} parent=1 // pred_fallthru
      _
    // Predicated region
    $region6: #{net1_forward.1} parent=1 // pred_check
      _
    $region7: #{net1_forward.1} parent=1 // pred_check_branch
      %18 = sbr.rel (0) target = $region9
    $region8: #{net1_forward.1} parent=1 // pred_region
      _
    $region9: #{net1_forward.1} parent=1 // pred_fallthru
      _
    // Predicated region
    $region10: #{net1_forward.1} parent=1 // pred_check
      _
    $region11: #{net1_forward.1} parent=1 // pred_check_branch
      %20 = sbr.rel (0) target = $region13
    $region12: #{net1_forward.1} parent=1 // pred_region
      _
    $region13: #{net1_forward.1} parent=1 // pred_fallthru
      _
    // Predicated region
    $region14: #{net1_forward.1} parent=1 // pred_check
      _
    $region15: #{net1_forward.1} parent=1 // pred_check_branch
      %22 = sbr.rel (0) target = $region17
    $region16: #{net1_forward.1} parent=1 // pred_region
      _
    $region17: #{net1_forward.1} parent=1 // pred_fallthru
      _
    // Predicated region
    $region18: #{net1_forward.1} parent=1 // pred_check
      _
    $region19: #{net1_forward.1} parent=1 // pred_check_branch
      %24 = sbr.rel (0) target = $region21
    $region20: #{net1_forward.1} parent=1 // pred_region
      _
    $region21: #{net1_forward.1} parent=1 // pred_fallthru
      _
    // Predicated region
    $region22: #{net1_forward.1} parent=1 // pred_check
      _
    $region23: #{net1_forward.1} parent=1 // pred_check_branch
      %26 = sbr.rel (0) target = $region25
    $region24: #{net1_forward.1} parent=1 // pred_region
      _
    $region25: #{net1_forward.1} parent=1 // pred_fallthru
      _
    // Predicated region
    $region26: #{net1_forward.1} parent=1 // pred_check
      _
    $region27: #{net1_forward.1} parent=1 // pred_check_branch
      %28 = sbr.rel (0) target = $region29
    $region28: #{net1_forward.1} parent=1 // pred_region
      _
    $region29: #{net1_forward.1} parent=1 // pred_fallthru
      _
    // Predicated region
    $region30: #{net1_forward.1} parent=1 // pred_check
      _
    $region31: #{net1_forward.1} parent=1 // pred_check_branch
      %30 = sbr.rel (0) target = $region33
    $region32: #{net1_forward.1} parent=1 // pred_region
      _
    $region33: #{net1_forward.1} parent=1 // pred_fallthru
      _
    // Predicated region
    $region34: #{net1_forward.1} parent=1 // pred_check
      _
    $region35: #{net1_forward.1} parent=1 // pred_check_branch
      %32 = sbr.rel (0) target = $region37
    $region36: #{net1_forward.1} parent=1 // pred_region
      _
    $region37: #{net1_forward.1} parent=1 // pred_fallthru
      _
    %v33 = vld [vmem:[%s0] sm:$0xff]
    %v34 = vld [vmem:[%s0 + $0x8] sm:$0xff]
    %v35 = vld [vmem:[%s0 + $0x10] sm:$0xff]
    %v36 = vld [vmem:[%s0 + $0x18] sm:$0xff]
    %v37 = vld [vmem:[%s0 + $0x20] sm:$0xff]
    %v38 = vld [vmem:[%s0 + $0x28] sm:$0xff]
    %v39 = vld [vmem:[%s0 + $0x30] sm:$0xff]
    %v40 = vld [vmem:[%s0 + $0x38] sm:$0xff]
    %v41 = vld [vmem:[%s0 + $0x40] sm:$0xff]
    %v42 = vld [vmem:[%s0 + $0x48] sm:$0xff]
    %v43 = vld [vmem:[%s0 + $0x50] sm:$0xff]
    %v44 = vld [vmem:[%s0 + $0x58] sm:$0xff]
    %v45 = vld [vmem:[%s0 + $0x60] sm:$0xff]
    %v46 = vld [vmem:[%s0 + $0x68] sm:$0xff]
    %v47 = vld [vmem:[%s0 + $0x70] sm:$0xff]
    %v48 = vld [vmem:[%s0 + $0x78] sm:$0xff]
    %v49 = vld [vmem:[%s0 + $0x80] sm:$0xff]
    %v50 = vld [vmem:[%s0 + $0x88] sm:$0xff]
    %v51 = vld [vmem:[%s0 + $0x90] sm:$0xff]
    %v52 = vld [vmem:[%s0 + $0x98] sm:$0xff]
    %v53 = vld [vmem:[%s0 + $0xa0] sm:$0xff]
    %v54 = vld [vmem:[%s0 + $0xa8] sm:$0xff]
    %v55 = vld [vmem:[%s0 + $0xb0] sm:$0xff]
    %v56 = vld [vmem:[%s0 + $0xb8] sm:$0xff]
    %v57 = vld [vmem:[%s0 + $0xc0] sm:$0xff]
    %v58 = vld [vmem:[%s0 + $0xc8] sm:$0xff]
    %v59 = vld [vmem:[%s0 + $0xd0] sm:$0xff]
    %v60 = vld [vmem:[%s0 + $0xd8] sm:$0xff]
    %v61 = vld [vmem:[%s0 + $0xe0] sm:$0xff]
    %v62 = vld [vmem:[%s0 + $0xe8] sm:$0xff]
    %v63 = vld [vmem:[%s0 + $0xf0] sm:$0xff]
    %v64 = vld [vmem:[%s0 + $0xf8] sm:$0xff]
    %v65 = vld [vmem:[%s0 + $0x100] sm:$0xff]
    %v66 = vld [vmem:[%s0 + $0x108] sm:$0xff]
    %v67 = vld [vmem:[%s0 + $0x110] sm:$0xff]
    %v68 = vld [vmem:[%s0 + $0x118] sm:$0xff]
    %v69 = vld [vmem:[%s0 + $0x120] sm:$0xff]
    %v70 = vld [vmem:[%s0 + $0x128] sm:$0xff]
    %v71 = vld [vmem:[%s0 + $0x130] sm:$0xff]
    %v72 = vld [vmem:[%s0 + $0x138] sm:$0xff]
    %v73 = vld [vmem:[%s0 + $0x140] sm:$0xff]
    %v74 = vld [vmem:[%s0 + $0x148] sm:$0xff]
    %v75 = vld [vmem:[%s0 + $0x150] sm:$0xff]
    %v76 = vld [vmem:[%s0 + $0x158] sm:$0xff]
    %v77 = vld [vmem:[%s0 + $0x160] sm:$0xff]
    %v78 = vld [vmem:[%s0 + $0x168] sm:$0xff]
    %v79 = vld [vmem:[%s0 + $0x170] sm:$0xff]
    %v80 = vld [vmem:[%s0 + $0x178] sm:$0xff]
    %v81 = vld [vmem:[%s0 + $0x180] sm:$0xff]
    %v82 = vld [vmem:[%s0 + $0x188] sm:$0xff]
    %v83 = vld [vmem:[%s0 + $0x190] sm:$0xff]
    %v84 = vld [vmem:[%s0 + $0x198] sm:$0xff]
    %v85 = vld [vmem:[%s0 + $0x1a0] sm:$0xff]
    %v86 = vld [vmem:[%s0 + $0x1a8] sm:$0xff]
    %v87 = vld [vmem:[%s0 + $0x1b0] sm:$0xff]
    %v88 = vld [vmem:[%s0 + $0x1b8] sm:$0xff]
    %v89 = vld [vmem:[%s0 + $0x1c0] sm:$0xff]
    %v90 = vld [vmem:[%s0 + $0x1c8] sm:$0xff]
    %v91 = vld [vmem:[%s0 + $0x1d0] sm:$0xff]
    %v92 = vld [vmem:[%s0 + $0x1d8] sm:$0xff]
    %v93 = vld [vmem:[%s0 + $0x1e0] sm:$0xff]
    %v94 = vld [vmem:[%s0 + $0x1e8] sm:$0xff]
    %v95 = vld [vmem:[%s0 + $0x1f0] sm:$0xff]
    %v96 = vld [vmem:[%s0 + $0x1f8] sm:$0xff]
    %v97 = vld [vmem:[%s0 + $0x200] sm:$0xff]
    %v98 = vld [vmem:[%s0 + $0x208] sm:$0xff]
    %v99 = vld [vmem:[%s0 + $0x210] sm:$0xff]
    %v100 = vld [vmem:[%s0 + $0x218] sm:$0xff]
    %v101 = vld [vmem:[%s0 + $0x220] sm:$0xff]
    %v102 = vld [vmem:[%s0 + $0x228] sm:$0xff]
    %v103 = vld [vmem:[%s0 + $0x230] sm:$0xff]
    %v104 = vld [vmem:[%s0 + $0x238] sm:$0xff]
    %v105 = vld [vmem:[%s0 + $0x240] sm:$0xff]
    %v106 = vld [vmem:[%s0 + $0x248] sm:$0xff]
    %v107 = vld [vmem:[%s0 + $0x250] sm:$0xff]
    %v108 = vld [vmem:[%s0 + $0x258] sm:$0xff]
    %v109 = vld [vmem:[%s0 + $0x260] sm:$0xff]
    %v110 = vld [vmem:[%s0 + $0x268] sm:$0xff]
    %v111 = vld [vmem:[%s0 + $0x270] sm:$0xff]
    %v112 = vld [vmem:[%s0 + $0x278] sm:$0xff]
    %v113 = vld [vmem:[%s0 + $0x280] sm:$0xff]
    %v114 = vld [vmem:[%s0 + $0x288] sm:$0xff]
    %v115 = vld [vmem:[%s0 + $0x290] sm:$0xff]
    %v116 = vld [vmem:[%s0 + $0x298] sm:$0xff]
    %v117 = vld [vmem:[%s0 + $0x2a0] sm:$0xff]
    %v118 = vld [vmem:[%s0 + $0x2a8] sm:$0xff]
    %v119 = vld [vmem:[%s0 + $0x2b0] sm:$0xff]
    %v120 = vld [vmem:[%s0 + $0x2b8] sm:$0xff]
    %v121 = vld [vmem:[%s0 + $0x2c0] sm:$0xff]
    %v122 = vld [vmem:[%s0 + $0x2c8] sm:$0xff]
    %v123 = vld [vmem:[%s0 + $0x2d0] sm:$0xff]
    %v124 = vld [vmem:[%s0 + $0x2d8] sm:$0xff]
    %v125 = vld [vmem:[%s0 + $0x2e0] sm:$0xff]
    %v126 = vld [vmem:[%s0 + $0x2e8] sm:$0xff]
    %v127 = vld [vmem:[%s0 + $0x2f0] sm:$0xff]
    %v128 = vld [vmem:[%s0 + $0x2f8] sm:$0xff]
    %v129 = vld [vmem:[%s0 + $0x300] sm:$0xff]
    %v130 = vld [vmem:[%s0 + $0x308] sm:$0xff]
    %v131 = vld [vmem:[%s0 + $0x310] sm:$0xff]
    %v132 = vld [vmem:[%s0 + $0x318] sm:$0xff]
    %v133 = vld [vmem:[%s0 + $0x320] sm:$0xff]
    %v134 = vld [vmem:[%s0 + $0x328] sm:$0xff]
    %v135 = vld [vmem:[%s0 + $0x330] sm:$0xff]
    %v136 = vld [vmem:[%s0 + $0x338] sm:$0xff]
    %v137 = vld [vmem:[%s0 + $0x340] sm:$0xff]
    %v138 = vld [vmem:[%s0 + $0x348] sm:$0xff]
    %v139 = vld [vmem:[%s0 + $0x350] sm:$0xff]
    %v140 = vld [vmem:[%s0 + $0x358] sm:$0xff]
    %v141 = vld [vmem:[%s0 + $0x360] sm:$0xff]
    %v142 = vld [vmem:[%s0 + $0x368] sm:$0xff]
    %v143 = vld [vmem:[%s0 + $0x370] sm:$0xff]
    %v144 = vld [vmem:[%s0 + $0x378] sm:$0xff]
    %v145 = vld [vmem:[%s0 + $0x380] sm:$0xff]
    %v146 = vld [vmem:[%s0 + $0x388] sm:$0xff]
    %v147 = vld [vmem:[%s0 + $0x390] sm:$0xff]
    %v148 = vld [vmem:[%s0 + $0x398] sm:$0xff]
    %v149 = vld [vmem:[%s0 + $0x3a0] sm:$0xff]
    %v150 = vld [vmem:[%s0 + $0x3a8] sm:$0xff]
    %v151 = vld [vmem:[%s0 + $0x3b0] sm:$0xff]
    %v152 = vld [vmem:[%s0 + $0x3b8] sm:$0xff]
    %v153 = vld [vmem:[%s0 + $0x3c0] sm:$0xff]
    %v154 = vld [vmem:[%s0 + $0x3c8] sm:$0xff]
    %v155 = vld [vmem:[%s0 + $0x3d0] sm:$0xff]
    %v156 = vld [vmem:[%s0 + $0x3d8] sm:$0xff]
    %v157 = vld [vmem:[%s0 + $0x3e0] sm:$0xff]
    %v158 = vld [vmem:[%s0 + $0x3e8] sm:$0xff]
    %v159 = vld [vmem:[%s0 + $0x3f0] sm:$0xff]
    %v160 = vld [vmem:[%s0 + $0x3f8] sm:$0xff]
    %v161 = vld [vmem:[%s0 + $0x400] sm:$0xff]
    %v162 = vld [vmem:[%s0 + $0x408] sm:$0xff]
    %v163 = vld [vmem:[%s0 + $0x410] sm:$0xff]
    %v164 = vld [vmem:[%s0 + $0x418] sm:$0xff]
    %v165 = vld [vmem:[%s0 + $0x420] sm:$0xff]
    %v166 = vld [vmem:[%s0 + $0x428] sm:$0xff]
    %v167 = vld [vmem:[%s0 + $0x430] sm:$0xff]
    %v168 = vld [vmem:[%s0 + $0x438] sm:$0xff]
    %v169 = vld [vmem:[%s0 + $0x440] sm:$0xff]
    %v170 = vld [vmem:[%s0 + $0x448] sm:$0xff]
    %v171 = vld [vmem:[%s0 + $0x450] sm:$0xff]
    %v172 = vld [vmem:[%s0 + $0x458] sm:$0xff]
    %v173 = vld [vmem:[%s0 + $0x460] sm:$0xff]
    %v174 = vld [vmem:[%s0 + $0x468] sm:$0xff]
    %v175 = vld [vmem:[%s0 + $0x470] sm:$0xff]
    %v176 = vld [vmem:[%s0 + $0x478] sm:$0xff]
    %v177 = vld [vmem:[%s0 + $0x480] sm:$0xff]
    %v178 = vld [vmem:[%s0 + $0x488] sm:$0xff]
    %v179 = vld [vmem:[%s0 + $0x490] sm:$0xff]
    %v180 = vld [vmem:[%s0 + $0x498] sm:$0xff]
    %v181 = vld [vmem:[%s0 + $0x4a0] sm:$0xff]
    %v182 = vld [vmem:[%s0 + $0x4a8] sm:$0xff]
    %v183 = vld [vmem:[%s0 + $0x4b0] sm:$0xff]
    %v184 = vld [vmem:[%s0 + $0x4b8] sm:$0xff]
    %v185 = vld [vmem:[%s0 + $0x4c0] sm:$0xff]
    %v186 = vld [vmem:[%s0 + $0x4c8] sm:$0xff]
    %v187 = vld [vmem:[%s0 + $0x4d0] sm:$0xff]
    %v188 = vld [vmem:[%s0 + $0x4d8] sm:$0xff]
    %v189 = vld [vmem:[%s0 + $0x4e0] sm:$0xff]
    %v190 = vld [vmem:[%s0 + $0x4e8] sm:$0xff]
    %v191 = vld [vmem:[%s0 + $0x4f0] sm:$0xff]
    %v192 = vld [vmem:[%s0 + $0x4f8] sm:$0xff]
    %v193 = vld [vmem:[%s0 + $0x500] sm:$0xff]
    %v194 = vld [vmem:[%s0 + $0x508] sm:$0xff]
    %v195 = vld [vmem:[%s0 + $0x510] sm:$0xff]
    %v196 = vld [vmem:[%s0 + $0x518] sm:$0xff]
    %v197 = vld [vmem:[%s0 + $0x520] sm:$0xff]
    %v198 = vld [vmem:[%s0 + $0x528] sm:$0xff]
    %v199 = vld [vmem:[%s0 + $0x530] sm:$0xff]
    %v200 = vld [vmem:[%s0 + $0x538] sm:$0xff]
    %v201 = vld [vmem:[%s0 + $0x540] sm:$0xff]
    %v202 = vld [vmem:[%s0 + $0x548] sm:$0xff]
    %v203 = vld [vmem:[%s0 + $0x550] sm:$0xff]
    %v204 = vld [vmem:[%s0 + $0x558] sm:$0xff]
    %v205 = vld [vmem:[%s0 + $0x560] sm:$0xff]
    %v206 = vld [vmem:[%s0 + $0x568] sm:$0xff]
    %v207 = vld [vmem:[%s0 + $0x570] sm:$0xff]
    %v208 = vld [vmem:[%s0 + $0x578] sm:$0xff]
    %v209 = vld [vmem:[%s0 + $0x580] sm:$0xff]
    %v210 = vld [vmem:[%s0 + $0x588] sm:$0xff]
    %v211 = vld [vmem:[%s0 + $0x590] sm:$0xff]
    %v212 = vld [vmem:[%s0 + $0x598] sm:$0xff]
    %v213 = vld [vmem:[%s0 + $0x5a0] sm:$0xff]
    %v214 = vld [vmem:[%s0 + $0x5a8] sm:$0xff]
    %v215 = vld [vmem:[%s0 + $0x5b0] sm:$0xff]
    %v216 = vld [vmem:[%s0 + $0x5b8] sm:$0xff]
    %v217 = vld [vmem:[%s0 + $0x5c0] sm:$0xff]
    %v218 = vld [vmem:[%s0 + $0x5c8] sm:$0xff]
    %v219 = vld [vmem:[%s0 + $0x5d0] sm:$0xff]
    %v220 = vld [vmem:[%s0 + $0x5d8] sm:$0xff]
    %v221 = vld [vmem:[%s0 + $0x5e0] sm:$0xff]
    %v222 = vld [vmem:[%s0 + $0x5e8] sm:$0xff]
    %v223 = vld [vmem:[%s0 + $0x5f0] sm:$0xff]
    %v224 = vld [vmem:[%s0 + $0x5f8] sm:$0xff]
    %v225 = vld [vmem:[%s0 + $0x600] sm:$0xff]
    %v226 = vld [vmem:[%s0 + $0x608] sm:$0xff]
    %v227 = vld [vmem:[%s0 + $0x610] sm:$0xff]
    %v228 = vld [vmem:[%s0 + $0x618] sm:$0xff]
    %v229 = vld [vmem:[%s0 + $0x620] sm:$0xff]
    %v230 = vld [vmem:[%s0 + $0x628] sm:$0xff]
    %v231 = vld [vmem:[%s0 + $0x630] sm:$0xff]
    %v232 = vld [vmem:[%s0 + $0x638] sm:$0xff]
    %v233 = vld [vmem:[%s0 + $0x640] sm:$0xff]
    %v234 = vld [vmem:[%s0 + $0x648] sm:$0xff]
    %v235 = vld [vmem:[%s0 + $0x650] sm:$0xff]
    %v236 = vld [vmem:[%s0 + $0x658] sm:$0xff]
    %v237 = vld [vmem:[%s0 + $0x660] sm:$0xff]
    %v238 = vld [vmem:[%s0 + $0x668] sm:$0xff]
    %v239 = vld [vmem:[%s0 + $0x670] sm:$0xff]
    %v240 = vld [vmem:[%s0 + $0x678] sm:$0xff]
    %v241 = vld [vmem:[%s0 + $0x680] sm:$0xff]
    %v242 = vld [vmem:[%s0 + $0x688] sm:$0xff]
    %v243 = vld [vmem:[%s0 + $0x690] sm:$0xff]
    %v244 = vld [vmem:[%s0 + $0x698] sm:$0xff]
    %v245 = vld [vmem:[%s0 + $0x6a0] sm:$0xff]
    %v246 = vld [vmem:[%s0 + $0x6a8] sm:$0xff]
    %v247 = vld [vmem:[%s0 + $0x6b0] sm:$0xff]
    %v248 = vld [vmem:[%s0 + $0x6b8] sm:$0xff]
    %v249 = vld [vmem:[%s0 + $0x6c0] sm:$0xff]
    %v250 = vld [vmem:[%s0 + $0x6c8] sm:$0xff]
    %v251 = vld [vmem:[%s0 + $0x6d0] sm:$0xff]
    %v252 = vld [vmem:[%s0 + $0x6d8] sm:$0xff]
    %v253 = vld [vmem:[%s0 + $0x6e0] sm:$0xff]
    %v254 = vld [vmem:[%s0 + $0x6e8] sm:$0xff]
    %v255 = vld [vmem:[%s0 + $0x6f0] sm:$0xff]
    %v256 = vld [vmem:[%s0 + $0x6f8] sm:$0xff]
    %v257 = vld [vmem:[%s0 + $0x700] sm:$0xff]
    %v258 = vld [vmem:[%s0 + $0x708] sm:$0xff]
    %v259 = vld [vmem:[%s0 + $0x710] sm:$0xff]
    %v260 = vld [vmem:[%s0 + $0x718] sm:$0xff]
    %v261 = vld [vmem:[%s0 + $0x720] sm:$0xff]
    %v262 = vld [vmem:[%s0 + $0x728] sm:$0xff]
    %v263 = vld [vmem:[%s0 + $0x730] sm:$0xff]
    %v264 = vld [vmem:[%s0 + $0x738] sm:$0xff]
    %v265 = vld [vmem:[%s0 + $0x740] sm:$0xff]
    %v266 = vld [vmem:[%s0 + $0x748] sm:$0xff]
    %v267 = vld [vmem:[%s0 + $0x750] sm:$0xff]
    %v268 = vld [vmem:[%s0 + $0x758] sm:$0xff]
    %v269 = vld [vmem:[%s0 + $0x760] sm:$0xff]
    %v270 = vld [vmem:[%s0 + $0x768] sm:$0xff]
    %v271 = vld [vmem:[%s0 + $0x770] sm:$0xff]
    %v272 = vld [vmem:[%s0 + $0x778] sm:$0xff]
    %v273 = vld [vmem:[%s0 + $0x780] sm:$0xff]
    %v274 = vld [vmem:[%s0 + $0x788] sm:$0xff]
    %v275 = vld [vmem:[%s0 + $0x790] sm:$0xff]
    %v276 = vld [vmem:[%s0 + $0x798] sm:$0xff]
    %v277 = vld [vmem:[%s0 + $0x7a0] sm:$0xff]
    %v278 = vld [vmem:[%s0 + $0x7a8] sm:$0xff]
    %v279 = vld [vmem:[%s0 + $0x7b0] sm:$0xff]
    %v280 = vld [vmem:[%s0 + $0x7b8] sm:$0xff]
    %v281 = vld [vmem:[%s0 + $0x7c0] sm:$0xff]
    %v282 = vld [vmem:[%s0 + $0x7c8] sm:$0xff]
    %v283 = vld [vmem:[%s0 + $0x7d0] sm:$0xff]
    %v284 = vld [vmem:[%s0 + $0x7d8] sm:$0xff]
    %v285 = vld [vmem:[%s0 + $0x7e0] sm:$0xff]
    %v286 = vld [vmem:[%s0 + $0x7e8] sm:$0xff]
    %v287 = vld [vmem:[%s0 + $0x7f0] sm:$0xff]
    %v288 = vld [vmem:[%s0 + $0x7f8] sm:$0xff]
    %v289 = vld [vmem:[%s1] sm:$0xff]
    %v290 = vld [vmem:[%s1 + $0x8] sm:$0xff]
    %v291 = vld [vmem:[%s1 + $0x10] sm:$0x3f]
    %v292 = vld [vmem:[%s2] sm:$0xff]
    %v293 = vld [vmem:[%s2 + $0x8] sm:$0xff]
    %v294 = vld [vmem:[%s2 + $0x10] sm:$0x3f]
    %296 = vset.pattern.permute.xlu0 0
    %297 = vperm.xlu0 %296, %v292
    %v298 = vpop.permute.xlu0 %297
    %301 = vset.pattern.permute.xlu0 0
    %302 = vperm.xlu0 %301, %v293
    %v303 = vpop.permute.xlu0 %302
    %306 = vset.pattern.permute.xlu0 0
    %307 = vperm.xlu0 %306, %v294
    %v308 = vpop.permute.xlu0 %307
    %vm310 = vcmask 179200
    %v312 = vsel %vm310, %v289, 0
    %v315 = vsel %vm310, %v290, 0
    %v318 = vsel %vm310, %v291, 0
    %v321 = vsel %vm310, %v33, 0
    %v324 = vsel %vm310, %v34, 0
    %v327 = vsel %vm310, %v35, 0
    %v330 = vsel %vm310, %v36, 0
    %v333 = vsel %vm310, %v37, 0
    %v336 = vsel %vm310, %v38, 0
    %v339 = vsel %vm310, %v39, 0
    %v342 = vsel %vm310, %v40, 0
    %v345 = vsel %vm310, %v41, 0
    %v348 = vsel %vm310, %v42, 0
    %v351 = vsel %vm310, %v43, 0
    %v354 = vsel %vm310, %v44, 0
    %v357 = vsel %vm310, %v45, 0
    %v360 = vsel %vm310, %v46, 0
    %v363 = vsel %vm310, %v47, 0
    %v366 = vsel %vm310, %v48, 0
    %v369 = vsel %vm310, %v49, 0
    %v372 = vsel %vm310, %v50, 0
    %v375 = vsel %vm310, %v51, 0
    %v378 = vsel %vm310, %v52, 0
    %v381 = vsel %vm310, %v53, 0
    %v384 = vsel %vm310, %v54, 0
    %v387 = vsel %vm310, %v55, 0
    %v390 = vsel %vm310, %v56, 0
    %v393 = vsel %vm310, %v57, 0
    %v396 = vsel %vm310, %v58, 0
    %v399 = vsel %vm310, %v59, 0
    %v402 = vsel %vm310, %v60, 0
    %v405 = vsel %vm310, %v61, 0
    %v408 = vsel %vm310, %v62, 0
    %v411 = vsel %vm310, %v63, 0
    %v414 = vsel %vm310, %v64, 0
    %v417 = vsel %vm310, %v65, 0
    %v420 = vsel %vm310, %v66, 0
    %v423 = vsel %vm310, %v67, 0
    %v426 = vsel %vm310, %v68, 0
    %v429 = vsel %vm310, %v69, 0
    %v432 = vsel %vm310, %v70, 0
    %v435 = vsel %vm310, %v71, 0
    %v438 = vsel %vm310, %v72, 0
    %v441 = vsel %vm310, %v73, 0
    %v444 = vsel %vm310, %v74, 0
    %v447 = vsel %vm310, %v75, 0
    %v450 = vsel %vm310, %v76, 0
    %v453 = vsel %vm310, %v77, 0
    %v456 = vsel %vm310, %v78, 0
    %v459 = vsel %vm310, %v79, 0
    %v462 = vsel %vm310, %v80, 0
    %v465 = vsel %vm310, %v81, 0
    %v468 = vsel %vm310, %v82, 0
    %v471 = vsel %vm310, %v83, 0
    %v474 = vsel %vm310, %v84, 0
    %v477 = vsel %vm310, %v85, 0
    %v480 = vsel %vm310, %v86, 0
    %v483 = vsel %vm310, %v87, 0
    %v486 = vsel %vm310, %v88, 0
    %v489 = vsel %vm310, %v89, 0
    %v492 = vsel %vm310, %v90, 0
    %v495 = vsel %vm310, %v91, 0
    %v498 = vsel %vm310, %v92, 0
    %v501 = vsel %vm310, %v93, 0
    %v504 = vsel %vm310, %v94, 0
    %v507 = vsel %vm310, %v95, 0
    %v510 = vsel %vm310, %v96, 0
    %v513 = vsel %vm310, %v97, 0
    %v516 = vsel %vm310, %v98, 0
    %v519 = vsel %vm310, %v99, 0
    %v522 = vsel %vm310, %v100, 0
    %v525 = vsel %vm310, %v101, 0
    %v528 = vsel %vm310, %v102, 0
    %v531 = vsel %vm310, %v103, 0
    %v534 = vsel %vm310, %v104, 0
    %v537 = vsel %vm310, %v105, 0
    %v540 = vsel %vm310, %v106, 0
    %v543 = vsel %vm310, %v107, 0
    %v546 = vsel %vm310, %v108, 0
    %v549 = vsel %vm310, %v109, 0
    %v552 = vsel %vm310, %v110, 0
    %v555 = vsel %vm310, %v111, 0
    %v558 = vsel %vm310, %v112, 0
    %v561 = vsel %vm310, %v113, 0
    %v564 = vsel %vm310, %v114, 0
    %v567 = vsel %vm310, %v115, 0
    %v570 = vsel %vm310, %v116, 0
    %v573 = vsel %vm310, %v117, 0
    %v576 = vsel %vm310, %v118, 0
    %v579 = vsel %vm310, %v119, 0
    %v582 = vsel %vm310, %v120, 0
    %v585 = vsel %vm310, %v121, 0
    %v588 = vsel %vm310, %v122, 0
    %v591 = vsel %vm310, %v123, 0
    %v594 = vsel %vm310, %v124, 0
    %v597 = vsel %vm310, %v125, 0
    %v600 = vsel %vm310, %v126, 0
    %v603 = vsel %vm310, %v127, 0
    %v606 = vsel %vm310, %v128, 0
    %v609 = vsel %vm310, %v129, 0
    %v612 = vsel %vm310, %v130, 0
    %v615 = vsel %vm310, %v131, 0
    %v618 = vsel %vm310, %v132, 0
    %v621 = vsel %vm310, %v133, 0
    %v624 = vsel %vm310, %v134, 0
    %v627 = vsel %vm310, %v135, 0
    %v630 = vsel %vm310, %v136, 0
    %v633 = vsel %vm310, %v137, 0
    %v636 = vsel %vm310, %v138, 0
    %v639 = vsel %vm310, %v139, 0
    %v642 = vsel %vm310, %v140, 0
    %v645 = vsel %vm310, %v141, 0
    %v648 = vsel %vm310, %v142, 0
    %v651 = vsel %vm310, %v143, 0
    %v654 = vsel %vm310, %v144, 0
    %v657 = vsel %vm310, %v145, 0
    %v660 = vsel %vm310, %v146, 0
    %v663 = vsel %vm310, %v147, 0
    %v666 = vsel %vm310, %v148, 0
    %v669 = vsel %vm310, %v149, 0
    %v672 = vsel %vm310, %v150, 0
    %v675 = vsel %vm310, %v151, 0
    %v678 = vsel %vm310, %v152, 0
    %v681 = vsel %vm310, %v153, 0
    %v684 = vsel %vm310, %v154, 0
    %v687 = vsel %vm310, %v155, 0
    %v690 = vsel %vm310, %v156, 0
    %v693 = vsel %vm310, %v157, 0
    %v696 = vsel %vm310, %v158, 0
    %v699 = vsel %vm310, %v159, 0
    %v702 = vsel %vm310, %v160, 0
    %v705 = vsel %vm310, %v161, 0
    %v708 = vsel %vm310, %v162, 0
    %v711 = vsel %vm310, %v163, 0
    %v714 = vsel %vm310, %v164, 0
    %v717 = vsel %vm310, %v165, 0
    %v720 = vsel %vm310, %v166, 0
    %v723 = vsel %vm310, %v167, 0
    %v726 = vsel %vm310, %v168, 0
    %v729 = vsel %vm310, %v169, 0
    %v732 = vsel %vm310, %v170, 0
    %v735 = vsel %vm310, %v171, 0
    %v738 = vsel %vm310, %v172, 0
    %v741 = vsel %vm310, %v173, 0
    %v744 = vsel %vm310, %v174, 0
    %v747 = vsel %vm310, %v175, 0
    %v750 = vsel %vm310, %v176, 0
    %v753 = vsel %vm310, %v177, 0
    %v756 = vsel %vm310, %v178, 0
    %v759 = vsel %vm310, %v179, 0
    %v762 = vsel %vm310, %v180, 0
    %v765 = vsel %vm310, %v181, 0
    %v768 = vsel %vm310, %v182, 0
    %v771 = vsel %vm310, %v183, 0
    %v774 = vsel %vm310, %v184, 0
    %v777 = vsel %vm310, %v185, 0
    %v780 = vsel %vm310, %v186, 0
    %v783 = vsel %vm310, %v187, 0
    %v786 = vsel %vm310, %v188, 0
    %v789 = vsel %vm310, %v189, 0
    %v792 = vsel %vm310, %v190, 0
    %v795 = vsel %vm310, %v191, 0
    %v798 = vsel %vm310, %v192, 0
    %v801 = vsel %vm310, %v193, 0
    %v804 = vsel %vm310, %v194, 0
    %v807 = vsel %vm310, %v195, 0
    %v810 = vsel %vm310, %v196, 0
    %v813 = vsel %vm310, %v197, 0
    %v816 = vsel %vm310, %v198, 0
    %v819 = vsel %vm310, %v199, 0
    %v822 = vsel %vm310, %v200, 0
    %v825 = vsel %vm310, %v201, 0
    %v828 = vsel %vm310, %v202, 0
    %v831 = vsel %vm310, %v203, 0
    %v834 = vsel %vm310, %v204, 0
    %v837 = vsel %vm310, %v205, 0
    %v840 = vsel %vm310, %v206, 0
    %v843 = vsel %vm310, %v207, 0
    %v846 = vsel %vm310, %v208, 0
    %v849 = vsel %vm310, %v209, 0
    %v852 = vsel %vm310, %v210, 0
    %v855 = vsel %vm310, %v211, 0
    %v858 = vsel %vm310, %v212, 0
    %v861 = vsel %vm310, %v213, 0
    %v864 = vsel %vm310, %v214, 0
    %v867 = vsel %vm310, %v215, 0
    %v870 = vsel %vm310, %v216, 0
    %v873 = vsel %vm310, %v217, 0
    %v876 = vsel %vm310, %v218, 0
    %v879 = vsel %vm310, %v219, 0
    %v882 = vsel %vm310, %v220, 0
    %v885 = vsel %vm310, %v221, 0
    %v888 = vsel %vm310, %v222, 0
    %v891 = vsel %vm310, %v223, 0
    %v894 = vsel %vm310, %v224, 0
    %v897 = vsel %vm310, %v225, 0
    %v900 = vsel %vm310, %v226, 0
    %v903 = vsel %vm310, %v227, 0
    %v906 = vsel %vm310, %v228, 0
    %v909 = vsel %vm310, %v229, 0
    %v912 = vsel %vm310, %v230, 0
    %v915 = vsel %vm310, %v231, 0
    %v918 = vsel %vm310, %v232, 0
    %v921 = vsel %vm310, %v233, 0
    %v924 = vsel %vm310, %v234, 0
    %v927 = vsel %vm310, %v235, 0
    %v930 = vsel %vm310, %v236, 0
    %v933 = vsel %vm310, %v237, 0
    %v936 = vsel %vm310, %v238, 0
    %v939 = vsel %vm310, %v239, 0
    %v942 = vsel %vm310, %v240, 0
    %v945 = vsel %vm310, %v241, 0
    %v948 = vsel %vm310, %v242, 0
    %v951 = vsel %vm310, %v243, 0
    %v954 = vsel %vm310, %v244, 0
    %v957 = vsel %vm310, %v245, 0
    %v960 = vsel %vm310, %v246, 0
    %v963 = vsel %vm310, %v247, 0
    %v966 = vsel %vm310, %v248, 0
    %v969 = vsel %vm310, %v249, 0
    %v972 = vsel %vm310, %v250, 0
    %v975 = vsel %vm310, %v251, 0
    %v978 = vsel %vm310, %v252, 0
    %v981 = vsel %vm310, %v253, 0
    %v984 = vsel %vm310, %v254, 0
    %v987 = vsel %vm310, %v255, 0
    %v990 = vsel %vm310, %v256, 0
    %v993 = vsel %vm310, %v257, 0
    %v996 = vsel %vm310, %v258, 0
    %v999 = vsel %vm310, %v259, 0
    %v1002 = vsel %vm310, %v260, 0
    %v1005 = vsel %vm310, %v261, 0
    %v1008 = vsel %vm310, %v262, 0
    %v1011 = vsel %vm310, %v263, 0
    %v1014 = vsel %vm310, %v264, 0
    %v1017 = vsel %vm310, %v265, 0
    %v1020 = vsel %vm310, %v266, 0
    %v1023 = vsel %vm310, %v267, 0
    %v1026 = vsel %vm310, %v268, 0
    %v1029 = vsel %vm310, %v269, 0
    %v1032 = vsel %vm310, %v270, 0
    %v1035 = vsel %vm310, %v271, 0
    %v1038 = vsel %vm310, %v272, 0
    %v1041 = vsel %vm310, %v273, 0
    %v1044 = vsel %vm310, %v274, 0
    %v1047 = vsel %vm310, %v275, 0
    %v1050 = vsel %vm310, %v276, 0
    %v1053 = vsel %vm310, %v277, 0
    %v1056 = vsel %vm310, %v278, 0
    %v1059 = vsel %vm310, %v279, 0
    %v1062 = vsel %vm310, %v280, 0
    %v1065 = vsel %vm310, %v281, 0
    %v1068 = vsel %vm310, %v282, 0
    %v1071 = vsel %vm310, %v283, 0
    %v1074 = vsel %vm310, %v284, 0
    %v1077 = vsel %vm310, %v285, 0
    %v1080 = vsel %vm310, %v286, 0
    %v1083 = vsel %vm310, %v287, 0
    %v1086 = vsel %vm310, %v288, 0
    %1088 = vmatpush.xpose.msra.mxu0 %v366
    %1089 = vmatpush.xpose.msra.mxu0 %v363
    %1090 = vmatpush.xpose.msra.mxu0 %v360
    %1091 = vmatpush.xpose.msra.mxu0 %v357
    %1092 = vmatpush.xpose.msra.mxu0 %v354
    %1093 = vmatpush.xpose.msra.mxu0 %v351
    %1094 = vmatpush.xpose.msra.mxu0 %v348
    %1095 = vmatpush.xpose.msra.mxu0 %v345
    %1096 = vmatpush.xpose.msra.mxu0 %v342
    %1097 = vmatpush.xpose.msra.mxu0 %v339
    %1098 = vmatpush.xpose.msra.mxu0 %v336
    %1099 = vmatpush.xpose.msra.mxu0 %v333
    %1100 = vmatpush.xpose.msra.mxu0 %v330
    %1101 = vmatpush.xpose.msra.mxu0 %v327
    %1102 = vmatpush.xpose.msra.mxu0 %v324
    %1103 = vmatpush.xpose.msra.mxu0 %v321
    %1104 = vmatmul.f32.gmra.mxu0 %v312
    %v1105 = vpop.f32.mrf.mxu0
    %v1106 = vadd.f32 %v298, %v1105
    %1107 = vmatmul.f32.gmra.mxu0 %v315
    %v1108 = vpop.f32.mrf.mxu0
    %v1109 = vadd.f32 %v303, %v1108
    %1110 = vmatmul.f32.gmra.mxu0 %v318
    %v1111 = vpop.f32.mrf.mxu0
    %v1112 = vadd.f32 %v308, %v1111
    %1113 = vdwg.mxu0
    %1114 = vmatpush.xpose.msra.mxu0 %v414
    %1115 = vmatpush.xpose.msra.mxu0 %v411
    %1116 = vmatpush.xpose.msra.mxu0 %v408
    %1117 = vmatpush.xpose.msra.mxu0 %v405
    %1118 = vmatpush.xpose.msra.mxu0 %v402
    %1119 = vmatpush.xpose.msra.mxu0 %v399
    %1120 = vmatpush.xpose.msra.mxu0 %v396
    %1121 = vmatpush.xpose.msra.mxu0 %v393
    %1122 = vmatpush.xpose.msra.mxu0 %v390
    %1123 = vmatpush.xpose.msra.mxu0 %v387
    %1124 = vmatpush.xpose.msra.mxu0 %v384
    %1125 = vmatpush.xpose.msra.mxu0 %v381
    %1126 = vmatpush.xpose.msra.mxu0 %v378
    %1127 = vmatpush.xpose.msra.mxu0 %v375
    %1128 = vmatpush.xpose.msra.mxu0 %v372
    %1129 = vmatpush.xpose.msra.mxu0 %v369
    %1130 = vmatmul.f32.gmra.mxu0 %v312
    %v1131 = vpop.f32.mrf.mxu0
    %v1132 = vadd.f32 %v298, %v1131
    %1133 = vmatmul.f32.gmra.mxu0 %v315
    %v1134 = vpop.f32.mrf.mxu0
    %v1135 = vadd.f32 %v303, %v1134
    %1136 = vmatmul.f32.gmra.mxu0 %v318
    %v1137 = vpop.f32.mrf.mxu0
    %v1138 = vadd.f32 %v308, %v1137
    %1139 = vdwg.mxu0
    %1140 = vmatpush.xpose.msra.mxu0 %v462
    %1141 = vmatpush.xpose.msra.mxu0 %v459
    %1142 = vmatpush.xpose.msra.mxu0 %v456
    %1143 = vmatpush.xpose.msra.mxu0 %v453
    %1144 = vmatpush.xpose.msra.mxu0 %v450
    %1145 = vmatpush.xpose.msra.mxu0 %v447
    %1146 = vmatpush.xpose.msra.mxu0 %v444
    %1147 = vmatpush.xpose.msra.mxu0 %v441
    %1148 = vmatpush.xpose.msra.mxu0 %v438
    %1149 = vmatpush.xpose.msra.mxu0 %v435
    %1150 = vmatpush.xpose.msra.mxu0 %v432
    %1151 = vmatpush.xpose.msra.mxu0 %v429
    %1152 = vmatpush.xpose.msra.mxu0 %v426
    %1153 = vmatpush.xpose.msra.mxu0 %v423
    %1154 = vmatpush.xpose.msra.mxu0 %v420
    %1155 = vmatpush.xpose.msra.mxu0 %v417
    %1156 = vmatmul.f32.gmra.mxu0 %v312
    %v1157 = vpop.f32.mrf.mxu0
    %v1158 = vadd.f32 %v298, %v1157
    %1159 = vmatmul.f32.gmra.mxu0 %v315
    %v1160 = vpop.f32.mrf.mxu0
    %v1161 = vadd.f32 %v303, %v1160
    %1162 = vmatmul.f32.gmra.mxu0 %v318
    %v1163 = vpop.f32.mrf.mxu0
    %v1164 = vadd.f32 %v308, %v1163
    %1165 = vdwg.mxu0
    %1166 = vmatpush.xpose.msra.mxu0 %v510
    %1167 = vmatpush.xpose.msra.mxu0 %v507
    %1168 = vmatpush.xpose.msra.mxu0 %v504
    %1169 = vmatpush.xpose.msra.mxu0 %v501
    %1170 = vmatpush.xpose.msra.mxu0 %v498
    %1171 = vmatpush.xpose.msra.mxu0 %v495
    %1172 = vmatpush.xpose.msra.mxu0 %v492
    %1173 = vmatpush.xpose.msra.mxu0 %v489
    %1174 = vmatpush.xpose.msra.mxu0 %v486
    %1175 = vmatpush.xpose.msra.mxu0 %v483
    %1176 = vmatpush.xpose.msra.mxu0 %v480
    %1177 = vmatpush.xpose.msra.mxu0 %v477
    %1178 = vmatpush.xpose.msra.mxu0 %v474
    %1179 = vmatpush.xpose.msra.mxu0 %v471
    %1180 = vmatpush.xpose.msra.mxu0 %v468
    %1181 = vmatpush.xpose.msra.mxu0 %v465
    %1182 = vmatmul.f32.gmra.mxu0 %v312
    %v1183 = vpop.f32.mrf.mxu0
    %v1184 = vadd.f32 %v298, %v1183
    %1185 = vmatmul.f32.gmra.mxu0 %v315
    %v1186 = vpop.f32.mrf.mxu0
    %v1187 = vadd.f32 %v303, %v1186
    %1188 = vmatmul.f32.gmra.mxu0 %v318
    %v1189 = vpop.f32.mrf.mxu0
    %v1190 = vadd.f32 %v308, %v1189
    %1191 = vdwg.mxu0
    %1192 = vmatpush.xpose.msra.mxu0 %v558
    %1193 = vmatpush.xpose.msra.mxu0 %v555
    %1194 = vmatpush.xpose.msra.mxu0 %v552
    %1195 = vmatpush.xpose.msra.mxu0 %v549
    %1196 = vmatpush.xpose.msra.mxu0 %v546
    %1197 = vmatpush.xpose.msra.mxu0 %v543
    %1198 = vmatpush.xpose.msra.mxu0 %v540
    %1199 = vmatpush.xpose.msra.mxu0 %v537
    %1200 = vmatpush.xpose.msra.mxu0 %v534
    %1201 = vmatpush.xpose.msra.mxu0 %v531
    %1202 = vmatpush.xpose.msra.mxu0 %v528
    %1203 = vmatpush.xpose.msra.mxu0 %v525
    %1204 = vmatpush.xpose.msra.mxu0 %v522
    %1205 = vmatpush.xpose.msra.mxu0 %v519
    %1206 = vmatpush.xpose.msra.mxu0 %v516
    %1207 = vmatpush.xpose.msra.mxu0 %v513
    %1208 = vmatmul.f32.gmra.mxu0 %v312
    %v1209 = vpop.f32.mrf.mxu0
    %v1210 = vadd.f32 %v298, %v1209
    %1211 = vmatmul.f32.gmra.mxu0 %v315
    %v1212 = vpop.f32.mrf.mxu0
    %v1213 = vadd.f32 %v303, %v1212
    %1214 = vmatmul.f32.gmra.mxu0 %v318
    %v1215 = vpop.f32.mrf.mxu0
    %v1216 = vadd.f32 %v308, %v1215
    %1217 = vdwg.mxu0
    %1218 = vmatpush.xpose.msra.mxu0 %v606
    %1219 = vmatpush.xpose.msra.mxu0 %v603
    %1220 = vmatpush.xpose.msra.mxu0 %v600
    %1221 = vmatpush.xpose.msra.mxu0 %v597
    %1222 = vmatpush.xpose.msra.mxu0 %v594
    %1223 = vmatpush.xpose.msra.mxu0 %v591
    %1224 = vmatpush.xpose.msra.mxu0 %v588
    %1225 = vmatpush.xpose.msra.mxu0 %v585
    %1226 = vmatpush.xpose.msra.mxu0 %v582
    %1227 = vmatpush.xpose.msra.mxu0 %v579
    %1228 = vmatpush.xpose.msra.mxu0 %v576
    %1229 = vmatpush.xpose.msra.mxu0 %v573
    %1230 = vmatpush.xpose.msra.mxu0 %v570
    %1231 = vmatpush.xpose.msra.mxu0 %v567
    %1232 = vmatpush.xpose.msra.mxu0 %v564
    %1233 = vmatpush.xpose.msra.mxu0 %v561
    %1234 = vmatmul.f32.gmra.mxu0 %v312
    %v1235 = vpop.f32.mrf.mxu0
    %v1236 = vadd.f32 %v298, %v1235
    %1237 = vmatmul.f32.gmra.mxu0 %v315
    %v1238 = vpop.f32.mrf.mxu0
    %v1239 = vadd.f32 %v303, %v1238
    %1240 = vmatmul.f32.gmra.mxu0 %v318
    %v1241 = vpop.f32.mrf.mxu0
    %v1242 = vadd.f32 %v308, %v1241
    %1243 = vdwg.mxu0
    %1244 = vmatpush.xpose.msra.mxu0 %v654
    %1245 = vmatpush.xpose.msra.mxu0 %v651
    %1246 = vmatpush.xpose.msra.mxu0 %v648
    %1247 = vmatpush.xpose.msra.mxu0 %v645
    %1248 = vmatpush.xpose.msra.mxu0 %v642
    %1249 = vmatpush.xpose.msra.mxu0 %v639
    %1250 = vmatpush.xpose.msra.mxu0 %v636
    %1251 = vmatpush.xpose.msra.mxu0 %v633
    %1252 = vmatpush.xpose.msra.mxu0 %v630
    %1253 = vmatpush.xpose.msra.mxu0 %v627
    %1254 = vmatpush.xpose.msra.mxu0 %v624
    %1255 = vmatpush.xpose.msra.mxu0 %v621
    %1256 = vmatpush.xpose.msra.mxu0 %v618
    %1257 = vmatpush.xpose.msra.mxu0 %v615
    %1258 = vmatpush.xpose.msra.mxu0 %v612
    %1259 = vmatpush.xpose.msra.mxu0 %v609
    %1260 = vmatmul.f32.gmra.mxu0 %v312
    %v1261 = vpop.f32.mrf.mxu0
    %v1262 = vadd.f32 %v298, %v1261
    %1263 = vmatmul.f32.gmra.mxu0 %v315
    %v1264 = vpop.f32.mrf.mxu0
    %v1265 = vadd.f32 %v303, %v1264
    %1266 = vmatmul.f32.gmra.mxu0 %v318
    %v1267 = vpop.f32.mrf.mxu0
    %v1268 = vadd.f32 %v308, %v1267
    %1269 = vdwg.mxu0
    %1270 = vmatpush.xpose.msra.mxu0 %v702
    %1271 = vmatpush.xpose.msra.mxu0 %v699
    %1272 = vmatpush.xpose.msra.mxu0 %v696
    %1273 = vmatpush.xpose.msra.mxu0 %v693
    %1274 = vmatpush.xpose.msra.mxu0 %v690
    %1275 = vmatpush.xpose.msra.mxu0 %v687
    %1276 = vmatpush.xpose.msra.mxu0 %v684
    %1277 = vmatpush.xpose.msra.mxu0 %v681
    %1278 = vmatpush.xpose.msra.mxu0 %v678
    %1279 = vmatpush.xpose.msra.mxu0 %v675
    %1280 = vmatpush.xpose.msra.mxu0 %v672
    %1281 = vmatpush.xpose.msra.mxu0 %v669
    %1282 = vmatpush.xpose.msra.mxu0 %v666
    %1283 = vmatpush.xpose.msra.mxu0 %v663
    %1284 = vmatpush.xpose.msra.mxu0 %v660
    %1285 = vmatpush.xpose.msra.mxu0 %v657
    %1286 = vmatmul.f32.gmra.mxu0 %v312
    %v1287 = vpop.f32.mrf.mxu0
    %v1288 = vadd.f32 %v298, %v1287
    %1289 = vmatmul.f32.gmra.mxu0 %v315
    %v1290 = vpop.f32.mrf.mxu0
    %v1291 = vadd.f32 %v303, %v1290
    %1292 = vmatmul.f32.gmra.mxu0 %v318
    %v1293 = vpop.f32.mrf.mxu0
    %v1294 = vadd.f32 %v308, %v1293
    %1295 = vdwg.mxu0
    %1296 = vmatpush.xpose.msra.mxu0 %v750
    %1297 = vmatpush.xpose.msra.mxu0 %v747
    %1298 = vmatpush.xpose.msra.mxu0 %v744
    %1299 = vmatpush.xpose.msra.mxu0 %v741
    %1300 = vmatpush.xpose.msra.mxu0 %v738
    %1301 = vmatpush.xpose.msra.mxu0 %v735
    %1302 = vmatpush.xpose.msra.mxu0 %v732
    %1303 = vmatpush.xpose.msra.mxu0 %v729
    %1304 = vmatpush.xpose.msra.mxu0 %v726
    %1305 = vmatpush.xpose.msra.mxu0 %v723
    %1306 = vmatpush.xpose.msra.mxu0 %v720
    %1307 = vmatpush.xpose.msra.mxu0 %v717
    %1308 = vmatpush.xpose.msra.mxu0 %v714
    %1309 = vmatpush.xpose.msra.mxu0 %v711
    %1310 = vmatpush.xpose.msra.mxu0 %v708
    %1311 = vmatpush.xpose.msra.mxu0 %v705
    %1312 = vmatmul.f32.gmra.mxu0 %v312
    %v1313 = vpop.f32.mrf.mxu0
    %v1314 = vadd.f32 %v298, %v1313
    %1315 = vmatmul.f32.gmra.mxu0 %v315
    %v1316 = vpop.f32.mrf.mxu0
    %v1317 = vadd.f32 %v303, %v1316
    %1318 = vmatmul.f32.gmra.mxu0 %v318
    %v1319 = vpop.f32.mrf.mxu0
    %v1320 = vadd.f32 %v308, %v1319
    %1321 = vdwg.mxu0
    %1322 = vmatpush.xpose.msra.mxu0 %v798
    %1323 = vmatpush.xpose.msra.mxu0 %v795
    %1324 = vmatpush.xpose.msra.mxu0 %v792
    %1325 = vmatpush.xpose.msra.mxu0 %v789
    %1326 = vmatpush.xpose.msra.mxu0 %v786
    %1327 = vmatpush.xpose.msra.mxu0 %v783
    %1328 = vmatpush.xpose.msra.mxu0 %v780
    %1329 = vmatpush.xpose.msra.mxu0 %v777
    %1330 = vmatpush.xpose.msra.mxu0 %v774
    %1331 = vmatpush.xpose.msra.mxu0 %v771
    %1332 = vmatpush.xpose.msra.mxu0 %v768
    %1333 = vmatpush.xpose.msra.mxu0 %v765
    %1334 = vmatpush.xpose.msra.mxu0 %v762
    %1335 = vmatpush.xpose.msra.mxu0 %v759
    %1336 = vmatpush.xpose.msra.mxu0 %v756
    %1337 = vmatpush.xpose.msra.mxu0 %v753
    %1338 = vmatmul.f32.gmra.mxu0 %v312
    %v1339 = vpop.f32.mrf.mxu0
    %v1340 = vadd.f32 %v298, %v1339
    %1341 = vmatmul.f32.gmra.mxu0 %v315
    %v1342 = vpop.f32.mrf.mxu0
    %v1343 = vadd.f32 %v303, %v1342
    %1344 = vmatmul.f32.gmra.mxu0 %v318
    %v1345 = vpop.f32.mrf.mxu0
    %v1346 = vadd.f32 %v308, %v1345
    %1347 = vdwg.mxu0
    %1348 = vmatpush.xpose.msra.mxu0 %v846
    %1349 = vmatpush.xpose.msra.mxu0 %v843
    %1350 = vmatpush.xpose.msra.mxu0 %v840
    %1351 = vmatpush.xpose.msra.mxu0 %v837
    %1352 = vmatpush.xpose.msra.mxu0 %v834
    %1353 = vmatpush.xpose.msra.mxu0 %v831
    %1354 = vmatpush.xpose.msra.mxu0 %v828
    %1355 = vmatpush.xpose.msra.mxu0 %v825
    %1356 = vmatpush.xpose.msra.mxu0 %v822
    %1357 = vmatpush.xpose.msra.mxu0 %v819
    %1358 = vmatpush.xpose.msra.mxu0 %v816
    %1359 = vmatpush.xpose.msra.mxu0 %v813
    %1360 = vmatpush.xpose.msra.mxu0 %v810
    %1361 = vmatpush.xpose.msra.mxu0 %v807
    %1362 = vmatpush.xpose.msra.mxu0 %v804
    %1363 = vmatpush.xpose.msra.mxu0 %v801
    %1364 = vmatmul.f32.gmra.mxu0 %v312
    %v1365 = vpop.f32.mrf.mxu0
    %v1366 = vadd.f32 %v298, %v1365
    %1367 = vmatmul.f32.gmra.mxu0 %v315
    %v1368 = vpop.f32.mrf.mxu0
    %v1369 = vadd.f32 %v303, %v1368
    %1370 = vmatmul.f32.gmra.mxu0 %v318
    %v1371 = vpop.f32.mrf.mxu0
    %v1372 = vadd.f32 %v308, %v1371
    %1373 = vdwg.mxu0
    %1374 = vmatpush.xpose.msra.mxu0 %v894
    %1375 = vmatpush.xpose.msra.mxu0 %v891
    %1376 = vmatpush.xpose.msra.mxu0 %v888
    %1377 = vmatpush.xpose.msra.mxu0 %v885
    %1378 = vmatpush.xpose.msra.mxu0 %v882
    %1379 = vmatpush.xpose.msra.mxu0 %v879
    %1380 = vmatpush.xpose.msra.mxu0 %v876
    %1381 = vmatpush.xpose.msra.mxu0 %v873
    %1382 = vmatpush.xpose.msra.mxu0 %v870
    %1383 = vmatpush.xpose.msra.mxu0 %v867
    %1384 = vmatpush.xpose.msra.mxu0 %v864
    %1385 = vmatpush.xpose.msra.mxu0 %v861
    %1386 = vmatpush.xpose.msra.mxu0 %v858
    %1387 = vmatpush.xpose.msra.mxu0 %v855
    %1388 = vmatpush.xpose.msra.mxu0 %v852
    %1389 = vmatpush.xpose.msra.mxu0 %v849
    %1390 = vmatmul.f32.gmra.mxu0 %v312
    %v1391 = vpop.f32.mrf.mxu0
    %v1392 = vadd.f32 %v298, %v1391
    %1393 = vmatmul.f32.gmra.mxu0 %v315
    %v1394 = vpop.f32.mrf.mxu0
    %v1395 = vadd.f32 %v303, %v1394
    %1396 = vmatmul.f32.gmra.mxu0 %v318
    %v1397 = vpop.f32.mrf.mxu0
    %v1398 = vadd.f32 %v308, %v1397
    %1399 = vdwg.mxu0
    %1400 = vmatpush.xpose.msra.mxu0 %v942
    %1401 = vmatpush.xpose.msra.mxu0 %v939
    %1402 = vmatpush.xpose.msra.mxu0 %v936
    %1403 = vmatpush.xpose.msra.mxu0 %v933
    %1404 = vmatpush.xpose.msra.mxu0 %v930
    %1405 = vmatpush.xpose.msra.mxu0 %v927
    %1406 = vmatpush.xpose.msra.mxu0 %v924
    %1407 = vmatpush.xpose.msra.mxu0 %v921
    %1408 = vmatpush.xpose.msra.mxu0 %v918
    %1409 = vmatpush.xpose.msra.mxu0 %v915
    %1410 = vmatpush.xpose.msra.mxu0 %v912
    %1411 = vmatpush.xpose.msra.mxu0 %v909
    %1412 = vmatpush.xpose.msra.mxu0 %v906
    %1413 = vmatpush.xpose.msra.mxu0 %v903
    %1414 = vmatpush.xpose.msra.mxu0 %v900
    %1415 = vmatpush.xpose.msra.mxu0 %v897
    %1416 = vmatmul.f32.gmra.mxu0 %v312
    %v1417 = vpop.f32.mrf.mxu0
    %v1418 = vadd.f32 %v298, %v1417
    %1419 = vmatmul.f32.gmra.mxu0 %v315
    %v1420 = vpop.f32.mrf.mxu0
    %v1421 = vadd.f32 %v303, %v1420
    %1422 = vmatmul.f32.gmra.mxu0 %v318
    %v1423 = vpop.f32.mrf.mxu0
    %v1424 = vadd.f32 %v308, %v1423
    %1425 = vdwg.mxu0
    %1426 = vmatpush.xpose.msra.mxu0 %v990
    %1427 = vmatpush.xpose.msra.mxu0 %v987
    %1428 = vmatpush.xpose.msra.mxu0 %v984
    %1429 = vmatpush.xpose.msra.mxu0 %v981
    %1430 = vmatpush.xpose.msra.mxu0 %v978
    %1431 = vmatpush.xpose.msra.mxu0 %v975
    %1432 = vmatpush.xpose.msra.mxu0 %v972
    %1433 = vmatpush.xpose.msra.mxu0 %v969
    %1434 = vmatpush.xpose.msra.mxu0 %v966
    %1435 = vmatpush.xpose.msra.mxu0 %v963
    %1436 = vmatpush.xpose.msra.mxu0 %v960
    %1437 = vmatpush.xpose.msra.mxu0 %v957
    %1438 = vmatpush.xpose.msra.mxu0 %v954
    %1439 = vmatpush.xpose.msra.mxu0 %v951
    %1440 = vmatpush.xpose.msra.mxu0 %v948
    %1441 = vmatpush.xpose.msra.mxu0 %v945
    %1442 = vmatmul.f32.gmra.mxu0 %v312
    %v1443 = vpop.f32.mrf.mxu0
    %v1444 = vadd.f32 %v298, %v1443
    %1445 = vmatmul.f32.gmra.mxu0 %v315
    %v1446 = vpop.f32.mrf.mxu0
    %v1447 = vadd.f32 %v303, %v1446
    %1448 = vmatmul.f32.gmra.mxu0 %v318
    %v1449 = vpop.f32.mrf.mxu0
    %v1450 = vadd.f32 %v308, %v1449
    %1451 = vdwg.mxu0
    %1452 = vmatpush.xpose.msra.mxu0 %v1038
    %1453 = vmatpush.xpose.msra.mxu0 %v1035
    %1454 = vmatpush.xpose.msra.mxu0 %v1032
    %1455 = vmatpush.xpose.msra.mxu0 %v1029
    %1456 = vmatpush.xpose.msra.mxu0 %v1026
    %1457 = vmatpush.xpose.msra.mxu0 %v1023
    %1458 = vmatpush.xpose.msra.mxu0 %v1020
    %1459 = vmatpush.xpose.msra.mxu0 %v1017
    %1460 = vmatpush.xpose.msra.mxu0 %v1014
    %1461 = vmatpush.xpose.msra.mxu0 %v1011
    %1462 = vmatpush.xpose.msra.mxu0 %v1008
    %1463 = vmatpush.xpose.msra.mxu0 %v1005
    %1464 = vmatpush.xpose.msra.mxu0 %v1002
    %1465 = vmatpush.xpose.msra.mxu0 %v999
    %1466 = vmatpush.xpose.msra.mxu0 %v996
    %1467 = vmatpush.xpose.msra.mxu0 %v993
    %1468 = vmatmul.f32.gmra.mxu0 %v312
    %v1469 = vpop.f32.mrf.mxu0
    %v1470 = vadd.f32 %v298, %v1469
    %1471 = vmatmul.f32.gmra.mxu0 %v315
    %v1472 = vpop.f32.mrf.mxu0
    %v1473 = vadd.f32 %v303, %v1472
    %1474 = vmatmul.f32.gmra.mxu0 %v318
    %v1475 = vpop.f32.mrf.mxu0
    %v1476 = vadd.f32 %v308, %v1475
    %1477 = vdwg.mxu0
    %1478 = vmatpush.xpose.msra.mxu0 %v1086
    %1479 = vmatpush.xpose.msra.mxu0 %v1083
    %1480 = vmatpush.xpose.msra.mxu0 %v1080
    %1481 = vmatpush.xpose.msra.mxu0 %v1077
    %1482 = vmatpush.xpose.msra.mxu0 %v1074
    %1483 = vmatpush.xpose.msra.mxu0 %v1071
    %1484 = vmatpush.xpose.msra.mxu0 %v1068
    %1485 = vmatpush.xpose.msra.mxu0 %v1065
    %1486 = vmatpush.xpose.msra.mxu0 %v1062
    %1487 = vmatpush.xpose.msra.mxu0 %v1059
    %1488 = vmatpush.xpose.msra.mxu0 %v1056
    %1489 = vmatpush.xpose.msra.mxu0 %v1053
    %1490 = vmatpush.xpose.msra.mxu0 %v1050
    %1491 = vmatpush.xpose.msra.mxu0 %v1047
    %1492 = vmatpush.xpose.msra.mxu0 %v1044
    %1493 = vmatpush.xpose.msra.mxu0 %v1041
    %1494 = vmatmul.f32.gmra.mxu0 %v312
    %v1495 = vpop.f32.mrf.mxu0
    %v1496 = vadd.f32 %v298, %v1495
    %1497 = vmatmul.f32.gmra.mxu0 %v315
    %v1498 = vpop.f32.mrf.mxu0
    %v1499 = vadd.f32 %v303, %v1498
    %1500 = vmatmul.f32.gmra.mxu0 %v318
    %v1501 = vpop.f32.mrf.mxu0
    %v1502 = vadd.f32 %v308, %v1501
    %1503 = vdwg.mxu0
    %v1504 = vmax.f32 %v1106, -1.0
    %v1505 = vmax.f32 %v1132, -1.0
    %v1506 = vmax.f32 %v1158, -1.0
    %v1507 = vmax.f32 %v1184, -1.0
    %v1508 = vmax.f32 %v1210, -1.0
    %v1509 = vmax.f32 %v1236, -1.0
    %v1510 = vmax.f32 %v1262, -1.0
    %v1511 = vmax.f32 %v1288, -1.0
    %v1512 = vmax.f32 %v1314, -1.0
    %v1513 = vmax.f32 %v1340, -1.0
    %v1514 = vmax.f32 %v1366, -1.0
    %v1515 = vmax.f32 %v1392, -1.0
    %v1516 = vmax.f32 %v1418, -1.0
    %v1517 = vmax.f32 %v1444, -1.0
    %v1518 = vmax.f32 %v1470, -1.0
    %v1519 = vmax.f32 %v1496, -1.0
    %v1520 = vmax.f32 %v1109, -1.0
    %v1521 = vmax.f32 %v1135, -1.0
    %v1522 = vmax.f32 %v1161, -1.0
    %v1523 = vmax.f32 %v1187, -1.0
    %v1524 = vmax.f32 %v1213, -1.0
    %v1525 = vmax.f32 %v1239, -1.0
    %v1526 = vmax.f32 %v1265, -1.0
    %v1527 = vmax.f32 %v1291, -1.0
    %v1528 = vmax.f32 %v1317, -1.0
    %v1529 = vmax.f32 %v1343, -1.0
    %v1530 = vmax.f32 %v1369, -1.0
    %v1531 = vmax.f32 %v1395, -1.0
    %v1532 = vmax.f32 %v1421, -1.0
    %v1533 = vmax.f32 %v1447, -1.0
    %v1534 = vmax.f32 %v1473, -1.0
    %v1535 = vmax.f32 %v1499, -1.0
    %v1536 = vmax.f32 %v1112, -1.0
    %v1537 = vmax.f32 %v1138, -1.0
    %v1538 = vmax.f32 %v1164, -1.0
    %v1539 = vmax.f32 %v1190, -1.0
    %v1540 = vmax.f32 %v1216, -1.0
    %v1541 = vmax.f32 %v1242, -1.0
    %v1542 = vmax.f32 %v1268, -1.0
    %v1543 = vmax.f32 %v1294, -1.0
    %v1544 = vmax.f32 %v1320, -1.0
    %v1545 = vmax.f32 %v1346, -1.0
    %v1546 = vmax.f32 %v1372, -1.0
    %v1547 = vmax.f32 %v1398, -1.0
    %v1548 = vmax.f32 %v1424, -1.0
    %v1549 = vmax.f32 %v1450, -1.0
    %v1550 = vmax.f32 %v1476, -1.0
    %v1551 = vmax.f32 %v1502, -1.0
    %v1552 = vmin.f32 %v1504, 1.0
    %v1553 = vmin.f32 %v1505, 1.0
    %v1554 = vmin.f32 %v1506, 1.0
    %v1555 = vmin.f32 %v1507, 1.0
    %v1556 = vmin.f32 %v1508, 1.0
    %v1557 = vmin.f32 %v1509, 1.0
    %v1558 = vmin.f32 %v1510, 1.0
    %v1559 = vmin.f32 %v1511, 1.0
    %v1560 = vmin.f32 %v1512, 1.0
    %v1561 = vmin.f32 %v1513, 1.0
    %v1562 = vmin.f32 %v1514, 1.0
    %v1563 = vmin.f32 %v1515, 1.0
    %v1564 = vmin.f32 %v1516, 1.0
    %v1565 = vmin.f32 %v1517, 1.0
    %v1566 = vmin.f32 %v1518, 1.0
    %v1567 = vmin.f32 %v1519, 1.0
    %v1568 = vmin.f32 %v1520, 1.0
    %v1569 = vmin.f32 %v1521, 1.0
    %v1570 = vmin.f32 %v1522, 1.0
    %v1571 = vmin.f32 %v1523, 1.0
    %v1572 = vmin.f32 %v1524, 1.0
    %v1573 = vmin.f32 %v1525, 1.0
    %v1574 = vmin.f32 %v1526, 1.0
    %v1575 = vmin.f32 %v1527, 1.0
    %v1576 = vmin.f32 %v1528, 1.0
    %v1577 = vmin.f32 %v1529, 1.0
    %v1578 = vmin.f32 %v1530, 1.0
    %v1579 = vmin.f32 %v1531, 1.0
    %v1580 = vmin.f32 %v1532, 1.0
    %v1581 = vmin.f32 %v1533, 1.0
    %v1582 = vmin.f32 %v1534, 1.0
    %v1583 = vmin.f32 %v1535, 1.0
    %v1584 = vmin.f32 %v1536, 1.0
    %v1585 = vmin.f32 %v1537, 1.0
    %v1586 = vmin.f32 %v1538, 1.0
    %v1587 = vmin.f32 %v1539, 1.0
    %v1588 = vmin.f32 %v1540, 1.0
    %v1589 = vmin.f32 %v1541, 1.0
    %v1590 = vmin.f32 %v1542, 1.0
    %v1591 = vmin.f32 %v1543, 1.0
    %v1592 = vmin.f32 %v1544, 1.0
    %v1593 = vmin.f32 %v1545, 1.0
    %v1594 = vmin.f32 %v1546, 1.0
    %v1595 = vmin.f32 %v1547, 1.0
    %v1596 = vmin.f32 %v1548, 1.0
    %v1597 = vmin.f32 %v1549, 1.0
    %v1598 = vmin.f32 %v1550, 1.0
    %v1599 = vmin.f32 %v1551, 1.0
    %v1600 = vld [vmem:[%s3] sm:$0x1f]
    %v1601 = vld [vmem:[%s4] sm:$0x1f]
    %1603 = vset.pattern.permute.xlu0 0
    %1604 = vperm.xlu0 %1603, %v1601
    %v1605 = vpop.permute.xlu0 %1604
    %v1608 = vsel %vm310, %v1600, 0
    %vm1610 = vcmask 1045504
    %v1612 = vsel %vm1610, %v1584, 0
    %v1615 = vsel %vm1610, %v1585, 0
    %v1618 = vsel %vm1610, %v1586, 0
    %v1621 = vsel %vm1610, %v1587, 0
    %v1624 = vsel %vm1610, %v1588, 0
    %v1627 = vsel %vm1610, %v1589, 0
    %v1630 = vsel %vm1610, %v1590, 0
    %v1633 = vsel %vm1610, %v1591, 0
    %v1636 = vsel %vm1610, %v1592, 0
    %v1639 = vsel %vm1610, %v1593, 0
    %v1642 = vsel %vm1610, %v1594, 0
    %v1645 = vsel %vm1610, %v1595, 0
    %v1648 = vsel %vm1610, %v1596, 0
    %v1651 = vsel %vm1610, %v1597, 0
    %v1654 = vsel %vm1610, %v1598, 0
    %v1657 = vsel %vm1610, %v1599, 0
    %1659 = vmatpush.msra.mxu0 0.0
    %1660 = vmatpush.msra.mxu0 0.0
    %1661 = vmatpush.msra.mxu0 0.0
    %1662 = vmatpush.msra.mxu0 0.0
    %1663 = vmatpush.msra.mxu0 0.0
    %1664 = vmatpush.msra.mxu0 0.0
    %1665 = vmatpush.msra.mxu0 0.0
    %1666 = vmatpush.msra.mxu0 0.0
    %1667 = vmatpush.msra.mxu0 0.0
    %1668 = vmatpush.msra.mxu0 0.0
    %1669 = vmatpush.msra.mxu0 0.0
    %1670 = vmatpush.msra.mxu0 0.0
    %1671 = vmatpush.msra.mxu0 0.0
    %1672 = vmatpush.msra.mxu0 %v1612
    %1673 = vmatpush.msra.mxu0 %v1568
    %1674 = vmatpush.msra.mxu0 %v1552
    %1675 = vmatmul.f32.gmra.mxu0 %v1608
    %v1676 = vpop.f32.mrf.mxu0
    %v1677 = vadd.f32 %v1605, %v1676
    %1678 = vdwg.mxu0
    %1679 = vmatpush.msra.mxu0 0.0
    %1680 = vmatpush.msra.mxu0 0.0
    %1681 = vmatpush.msra.mxu0 0.0
    %1682 = vmatpush.msra.mxu0 0.0
    %1683 = vmatpush.msra.mxu0 0.0
    %1684 = vmatpush.msra.mxu0 0.0
    %1685 = vmatpush.msra.mxu0 0.0
    %1686 = vmatpush.msra.mxu0 0.0
    %1687 = vmatpush.msra.mxu0 0.0
    %1688 = vmatpush.msra.mxu0 0.0
    %1689 = vmatpush.msra.mxu0 0.0
    %1690 = vmatpush.msra.mxu0 0.0
    %1691 = vmatpush.msra.mxu0 0.0
    %1692 = vmatpush.msra.mxu0 %v1615
    %1693 = vmatpush.msra.mxu0 %v1569
    %1694 = vmatpush.msra.mxu0 %v1553
    %1695 = vmatmul.f32.gmra.mxu0 %v1608
    %v1696 = vpop.f32.mrf.mxu0
    %v1697 = vadd.f32 %v1605, %v1696
    %1698 = vdwg.mxu0
    %1699 = vmatpush.msra.mxu0 0.0
    %1700 = vmatpush.msra.mxu0 0.0
    %1701 = vmatpush.msra.mxu0 0.0
    %1702 = vmatpush.msra.mxu0 0.0
    %1703 = vmatpush.msra.mxu0 0.0
    %1704 = vmatpush.msra.mxu0 0.0
    %1705 = vmatpush.msra.mxu0 0.0
    %1706 = vmatpush.msra.mxu0 0.0
    %1707 = vmatpush.msra.mxu0 0.0
    %1708 = vmatpush.msra.mxu0 0.0
    %1709 = vmatpush.msra.mxu0 0.0
    %1710 = vmatpush.msra.mxu0 0.0
    %1711 = vmatpush.msra.mxu0 0.0
    %1712 = vmatpush.msra.mxu0 %v1618
    %1713 = vmatpush.msra.mxu0 %v1570
    %1714 = vmatpush.msra.mxu0 %v1554
    %1715 = vmatmul.f32.gmra.mxu0 %v1608
    %v1716 = vpop.f32.mrf.mxu0
    %v1717 = vadd.f32 %v1605, %v1716
    %1718 = vdwg.mxu0
    %1719 = vmatpush.msra.mxu0 0.0
    %1720 = vmatpush.msra.mxu0 0.0
    %1721 = vmatpush.msra.mxu0 0.0
    %1722 = vmatpush.msra.mxu0 0.0
    %1723 = vmatpush.msra.mxu0 0.0
    %1724 = vmatpush.msra.mxu0 0.0
    %1725 = vmatpush.msra.mxu0 0.0
    %1726 = vmatpush.msra.mxu0 0.0
    %1727 = vmatpush.msra.mxu0 0.0
    %1728 = vmatpush.msra.mxu0 0.0
    %1729 = vmatpush.msra.mxu0 0.0
    %1730 = vmatpush.msra.mxu0 0.0
    %1731 = vmatpush.msra.mxu0 0.0
    %1732 = vmatpush.msra.mxu0 %v1621
    %1733 = vmatpush.msra.mxu0 %v1571
    %1734 = vmatpush.msra.mxu0 %v1555
    %1735 = vmatmul.f32.gmra.mxu0 %v1608
    %v1736 = vpop.f32.mrf.mxu0
    %v1737 = vadd.f32 %v1605, %v1736
    %1738 = vdwg.mxu0
    %1739 = vmatpush.msra.mxu0 0.0
    %1740 = vmatpush.msra.mxu0 0.0
    %1741 = vmatpush.msra.mxu0 0.0
    %1742 = vmatpush.msra.mxu0 0.0
    %1743 = vmatpush.msra.mxu0 0.0
    %1744 = vmatpush.msra.mxu0 0.0
    %1745 = vmatpush.msra.mxu0 0.0
    %1746 = vmatpush.msra.mxu0 0.0
    %1747 = vmatpush.msra.mxu0 0.0
    %1748 = vmatpush.msra.mxu0 0.0
    %1749 = vmatpush.msra.mxu0 0.0
    %1750 = vmatpush.msra.mxu0 0.0
    %1751 = vmatpush.msra.mxu0 0.0
    %1752 = vmatpush.msra.mxu0 %v1624
    %1753 = vmatpush.msra.mxu0 %v1572
    %1754 = vmatpush.msra.mxu0 %v1556
    %1755 = vmatmul.f32.gmra.mxu0 %v1608
    %v1756 = vpop.f32.mrf.mxu0
    %v1757 = vadd.f32 %v1605, %v1756
    %1758 = vdwg.mxu0
    %1759 = vmatpush.msra.mxu0 0.0
    %1760 = vmatpush.msra.mxu0 0.0
    %1761 = vmatpush.msra.mxu0 0.0
    %1762 = vmatpush.msra.mxu0 0.0
    %1763 = vmatpush.msra.mxu0 0.0
    %1764 = vmatpush.msra.mxu0 0.0
    %1765 = vmatpush.msra.mxu0 0.0
    %1766 = vmatpush.msra.mxu0 0.0
    %1767 = vmatpush.msra.mxu0 0.0
    %1768 = vmatpush.msra.mxu0 0.0
    %1769 = vmatpush.msra.mxu0 0.0
    %1770 = vmatpush.msra.mxu0 0.0
    %1771 = vmatpush.msra.mxu0 0.0
    %1772 = vmatpush.msra.mxu0 %v1627
    %1773 = vmatpush.msra.mxu0 %v1573
    %1774 = vmatpush.msra.mxu0 %v1557
    %1775 = vmatmul.f32.gmra.mxu0 %v1608
    %v1776 = vpop.f32.mrf.mxu0
    %v1777 = vadd.f32 %v1605, %v1776
    %1778 = vdwg.mxu0
    %1779 = vmatpush.msra.mxu0 0.0
    %1780 = vmatpush.msra.mxu0 0.0
    %1781 = vmatpush.msra.mxu0 0.0
    %1782 = vmatpush.msra.mxu0 0.0
    %1783 = vmatpush.msra.mxu0 0.0
    %1784 = vmatpush.msra.mxu0 0.0
    %1785 = vmatpush.msra.mxu0 0.0
    %1786 = vmatpush.msra.mxu0 0.0
    %1787 = vmatpush.msra.mxu0 0.0
    %1788 = vmatpush.msra.mxu0 0.0
    %1789 = vmatpush.msra.mxu0 0.0
    %1790 = vmatpush.msra.mxu0 0.0
    %1791 = vmatpush.msra.mxu0 0.0
    %1792 = vmatpush.msra.mxu0 %v1630
    %1793 = vmatpush.msra.mxu0 %v1574
    %1794 = vmatpush.msra.mxu0 %v1558
    %1795 = vmatmul.f32.gmra.mxu0 %v1608
    %v1796 = vpop.f32.mrf.mxu0
    %v1797 = vadd.f32 %v1605, %v1796
    %1798 = vdwg.mxu0
    %1799 = vmatpush.msra.mxu0 0.0
    %1800 = vmatpush.msra.mxu0 0.0
    %1801 = vmatpush.msra.mxu0 0.0
    %1802 = vmatpush.msra.mxu0 0.0
    %1803 = vmatpush.msra.mxu0 0.0
    %1804 = vmatpush.msra.mxu0 0.0
    %1805 = vmatpush.msra.mxu0 0.0
    %1806 = vmatpush.msra.mxu0 0.0
    %1807 = vmatpush.msra.mxu0 0.0
    %1808 = vmatpush.msra.mxu0 0.0
    %1809 = vmatpush.msra.mxu0 0.0
    %1810 = vmatpush.msra.mxu0 0.0
    %1811 = vmatpush.msra.mxu0 0.0
    %1812 = vmatpush.msra.mxu0 %v1633
    %1813 = vmatpush.msra.mxu0 %v1575
    %1814 = vmatpush.msra.mxu0 %v1559
    %1815 = vmatmul.f32.gmra.mxu0 %v1608
    %v1816 = vpop.f32.mrf.mxu0
    %v1817 = vadd.f32 %v1605, %v1816
    %1818 = vdwg.mxu0
    %1819 = vmatpush.msra.mxu0 0.0
    %1820 = vmatpush.msra.mxu0 0.0
    %1821 = vmatpush.msra.mxu0 0.0
    %1822 = vmatpush.msra.mxu0 0.0
    %1823 = vmatpush.msra.mxu0 0.0
    %1824 = vmatpush.msra.mxu0 0.0
    %1825 = vmatpush.msra.mxu0 0.0
    %1826 = vmatpush.msra.mxu0 0.0
    %1827 = vmatpush.msra.mxu0 0.0
    %1828 = vmatpush.msra.mxu0 0.0
    %1829 = vmatpush.msra.mxu0 0.0
    %1830 = vmatpush.msra.mxu0 0.0
    %1831 = vmatpush.msra.mxu0 0.0
    %1832 = vmatpush.msra.mxu0 %v1636
    %1833 = vmatpush.msra.mxu0 %v1576
    %1834 = vmatpush.msra.mxu0 %v1560
    %1835 = vmatmul.f32.gmra.mxu0 %v1608
    %v1836 = vpop.f32.mrf.mxu0
    %v1837 = vadd.f32 %v1605, %v1836
    %1838 = vdwg.mxu0
    %1839 = vmatpush.msra.mxu0 0.0
    %1840 = vmatpush.msra.mxu0 0.0
    %1841 = vmatpush.msra.mxu0 0.0
    %1842 = vmatpush.msra.mxu0 0.0
    %1843 = vmatpush.msra.mxu0 0.0
    %1844 = vmatpush.msra.mxu0 0.0
    %1845 = vmatpush.msra.mxu0 0.0
    %1846 = vmatpush.msra.mxu0 0.0
    %1847 = vmatpush.msra.mxu0 0.0
    %1848 = vmatpush.msra.mxu0 0.0
    %1849 = vmatpush.msra.mxu0 0.0
    %1850 = vmatpush.msra.mxu0 0.0
    %1851 = vmatpush.msra.mxu0 0.0
    %1852 = vmatpush.msra.mxu0 %v1639
    %1853 = vmatpush.msra.mxu0 %v1577
    %1854 = vmatpush.msra.mxu0 %v1561
    %1855 = vmatmul.f32.gmra.mxu0 %v1608
    %v1856 = vpop.f32.mrf.mxu0
    %v1857 = vadd.f32 %v1605, %v1856
    %1858 = vdwg.mxu0
    %1859 = vmatpush.msra.mxu0 0.0
    %1860 = vmatpush.msra.mxu0 0.0
    %1861 = vmatpush.msra.mxu0 0.0
    %1862 = vmatpush.msra.mxu0 0.0
    %1863 = vmatpush.msra.mxu0 0.0
    %1864 = vmatpush.msra.mxu0 0.0
    %1865 = vmatpush.msra.mxu0 0.0
    %1866 = vmatpush.msra.mxu0 0.0
    %1867 = vmatpush.msra.mxu0 0.0
    %1868 = vmatpush.msra.mxu0 0.0
    %1869 = vmatpush.msra.mxu0 0.0
    %1870 = vmatpush.msra.mxu0 0.0
    %1871 = vmatpush.msra.mxu0 0.0
    %1872 = vmatpush.msra.mxu0 %v1642
    %1873 = vmatpush.msra.mxu0 %v1578
    %1874 = vmatpush.msra.mxu0 %v1562
    %1875 = vmatmul.f32.gmra.mxu0 %v1608
    %v1876 = vpop.f32.mrf.mxu0
    %v1877 = vadd.f32 %v1605, %v1876
    %1878 = vdwg.mxu0
    %1879 = vmatpush.msra.mxu0 0.0
    %1880 = vmatpush.msra.mxu0 0.0
    %1881 = vmatpush.msra.mxu0 0.0
    %1882 = vmatpush.msra.mxu0 0.0
    %1883 = vmatpush.msra.mxu0 0.0
    %1884 = vmatpush.msra.mxu0 0.0
    %1885 = vmatpush.msra.mxu0 0.0
    %1886 = vmatpush.msra.mxu0 0.0
    %1887 = vmatpush.msra.mxu0 0.0
    %1888 = vmatpush.msra.mxu0 0.0
    %1889 = vmatpush.msra.mxu0 0.0
    %1890 = vmatpush.msra.mxu0 0.0
    %1891 = vmatpush.msra.mxu0 0.0
    %1892 = vmatpush.msra.mxu0 %v1645
    %1893 = vmatpush.msra.mxu0 %v1579
    %1894 = vmatpush.msra.mxu0 %v1563
    %1895 = vmatmul.f32.gmra.mxu0 %v1608
    %v1896 = vpop.f32.mrf.mxu0
    %v1897 = vadd.f32 %v1605, %v1896
    %1898 = vdwg.mxu0
    %1899 = vmatpush.msra.mxu0 0.0
    %1900 = vmatpush.msra.mxu0 0.0
    %1901 = vmatpush.msra.mxu0 0.0
    %1902 = vmatpush.msra.mxu0 0.0
    %1903 = vmatpush.msra.mxu0 0.0
    %1904 = vmatpush.msra.mxu0 0.0
    %1905 = vmatpush.msra.mxu0 0.0
    %1906 = vmatpush.msra.mxu0 0.0
    %1907 = vmatpush.msra.mxu0 0.0
    %1908 = vmatpush.msra.mxu0 0.0
    %1909 = vmatpush.msra.mxu0 0.0
    %1910 = vmatpush.msra.mxu0 0.0
    %1911 = vmatpush.msra.mxu0 0.0
    %1912 = vmatpush.msra.mxu0 %v1648
    %1913 = vmatpush.msra.mxu0 %v1580
    %1914 = vmatpush.msra.mxu0 %v1564
    %1915 = vmatmul.f32.gmra.mxu0 %v1608
    %v1916 = vpop.f32.mrf.mxu0
    %v1917 = vadd.f32 %v1605, %v1916
    %1918 = vdwg.mxu0
    %1919 = vmatpush.msra.mxu0 0.0
    %1920 = vmatpush.msra.mxu0 0.0
    %1921 = vmatpush.msra.mxu0 0.0
    %1922 = vmatpush.msra.mxu0 0.0
    %1923 = vmatpush.msra.mxu0 0.0
    %1924 = vmatpush.msra.mxu0 0.0
    %1925 = vmatpush.msra.mxu0 0.0
    %1926 = vmatpush.msra.mxu0 0.0
    %1927 = vmatpush.msra.mxu0 0.0
    %1928 = vmatpush.msra.mxu0 0.0
    %1929 = vmatpush.msra.mxu0 0.0
    %1930 = vmatpush.msra.mxu0 0.0
    %1931 = vmatpush.msra.mxu0 0.0
    %1932 = vmatpush.msra.mxu0 %v1651
    %1933 = vmatpush.msra.mxu0 %v1581
    %1934 = vmatpush.msra.mxu0 %v1565
    %1935 = vmatmul.f32.gmra.mxu0 %v1608
    %v1936 = vpop.f32.mrf.mxu0
    %v1937 = vadd.f32 %v1605, %v1936
    %1938 = vdwg.mxu0
    %1939 = vmatpush.msra.mxu0 0.0
    %1940 = vmatpush.msra.mxu0 0.0
    %1941 = vmatpush.msra.mxu0 0.0
    %1942 = vmatpush.msra.mxu0 0.0
    %1943 = vmatpush.msra.mxu0 0.0
    %1944 = vmatpush.msra.mxu0 0.0
    %1945 = vmatpush.msra.mxu0 0.0
    %1946 = vmatpush.msra.mxu0 0.0
    %1947 = vmatpush.msra.mxu0 0.0
    %1948 = vmatpush.msra.mxu0 0.0
    %1949 = vmatpush.msra.mxu0 0.0
    %1950 = vmatpush.msra.mxu0 0.0
    %1951 = vmatpush.msra.mxu0 0.0
    %1952 = vmatpush.msra.mxu0 %v1654
    %1953 = vmatpush.msra.mxu0 %v1582
    %1954 = vmatpush.msra.mxu0 %v1566
    %1955 = vmatmul.f32.gmra.mxu0 %v1608
    %v1956 = vpop.f32.mrf.mxu0
    %v1957 = vadd.f32 %v1605, %v1956
    %1958 = vdwg.mxu0
    %1959 = vmatpush.msra.mxu0 0.0
    %1960 = vmatpush.msra.mxu0 0.0
    %1961 = vmatpush.msra.mxu0 0.0
    %1962 = vmatpush.msra.mxu0 0.0
    %1963 = vmatpush.msra.mxu0 0.0
    %1964 = vmatpush.msra.mxu0 0.0
    %1965 = vmatpush.msra.mxu0 0.0
    %1966 = vmatpush.msra.mxu0 0.0
    %1967 = vmatpush.msra.mxu0 0.0
    %1968 = vmatpush.msra.mxu0 0.0
    %1969 = vmatpush.msra.mxu0 0.0
    %1970 = vmatpush.msra.mxu0 0.0
    %1971 = vmatpush.msra.mxu0 0.0
    %1972 = vmatpush.msra.mxu0 %v1657
    %1973 = vmatpush.msra.mxu0 %v1583
    %1974 = vmatpush.msra.mxu0 %v1567
    %1975 = vmatmul.f32.gmra.mxu0 %v1608
    %v1976 = vpop.f32.mrf.mxu0
    %v1977 = vadd.f32 %v1605, %v1976
    %1978 = vdwg.mxu0
    %v1979 = vmax.f32 %v1677, -1.0
    %v1980 = vmax.f32 %v1697, -1.0
    %v1981 = vmax.f32 %v1717, -1.0
    %v1982 = vmax.f32 %v1737, -1.0
    %v1983 = vmax.f32 %v1757, -1.0
    %v1984 = vmax.f32 %v1777, -1.0
    %v1985 = vmax.f32 %v1797, -1.0
    %v1986 = vmax.f32 %v1817, -1.0
    %v1987 = vmax.f32 %v1837, -1.0
    %v1988 = vmax.f32 %v1857, -1.0
    %v1989 = vmax.f32 %v1877, -1.0
    %v1990 = vmax.f32 %v1897, -1.0
    %v1991 = vmax.f32 %v1917, -1.0
    %v1992 = vmax.f32 %v1937, -1.0
    %v1993 = vmax.f32 %v1957, -1.0
    %v1994 = vmax.f32 %v1977, -1.0
    %v1995 = vmin.f32 %v1979, 1.0
    %v1996 = vmin.f32 %v1980, 1.0
    %v1997 = vmin.f32 %v1981, 1.0
    %v1998 = vmin.f32 %v1982, 1.0
    %v1999 = vmin.f32 %v1983, 1.0
    %v2000 = vmin.f32 %v1984, 1.0
    %v2001 = vmin.f32 %v1985, 1.0
    %v2002 = vmin.f32 %v1986, 1.0
    %v2003 = vmin.f32 %v1987, 1.0
    %v2004 = vmin.f32 %v1988, 1.0
    %v2005 = vmin.f32 %v1989, 1.0
    %v2006 = vmin.f32 %v1990, 1.0
    %v2007 = vmin.f32 %v1991, 1.0
    %v2008 = vmin.f32 %v1992, 1.0
    %v2009 = vmin.f32 %v1993, 1.0
    %v2010 = vmin.f32 %v1994, 1.0
    %v2011 = vld [vmem:[%s5] sm:$0x1f]
    %v2012 = vld [vmem:[%s6] sm:$0x1f]
    %2014 = vset.pattern.permute.xlu0 0
    %2015 = vperm.xlu0 %2014, %v2012
    %v2016 = vpop.permute.xlu0 %2015
    %vm2018 = vcmask 39936
    %v2020 = vsel %vm2018, %v2011, 0
    %vm2022 = vcmask 1044480
    %v2024 = vsel %vm2022, %v1995, 0
    %v2027 = vsel %vm2022, %v1996, 0
    %v2030 = vsel %vm2022, %v1997, 0
    %v2033 = vsel %vm2022, %v1998, 0
    %v2036 = vsel %vm2022, %v1999, 0
    %v2039 = vsel %vm2022, %v2000, 0
    %v2042 = vsel %vm2022, %v2001, 0
    %v2045 = vsel %vm2022, %v2002, 0
    %v2048 = vsel %vm2022, %v2003, 0
    %v2051 = vsel %vm2022, %v2004, 0
    %v2054 = vsel %vm2022, %v2005, 0
    %v2057 = vsel %vm2022, %v2006, 0
    %v2060 = vsel %vm2022, %v2007, 0
    %v2063 = vsel %vm2022, %v2008, 0
    %v2066 = vsel %vm2022, %v2009, 0
    %v2069 = vsel %vm2022, %v2010, 0
    %2071 = vmatpush.msra.mxu0 0.0
    %2072 = vmatpush.msra.mxu0 0.0
    %2073 = vmatpush.msra.mxu0 0.0
    %2074 = vmatpush.msra.mxu0 0.0
    %2075 = vmatpush.msra.mxu0 0.0
    %2076 = vmatpush.msra.mxu0 0.0
    %2077 = vmatpush.msra.mxu0 0.0
    %2078 = vmatpush.msra.mxu0 0.0
    %2079 = vmatpush.msra.mxu0 0.0
    %2080 = vmatpush.msra.mxu0 0.0
    %2081 = vmatpush.msra.mxu0 0.0
    %2082 = vmatpush.msra.mxu0 0.0
    %2083 = vmatpush.msra.mxu0 0.0
    %2084 = vmatpush.msra.mxu0 0.0
    %2085 = vmatpush.msra.mxu0 0.0
    %2086 = vmatpush.msra.mxu0 %v2024
    %2087 = vmatmul.f32.gmra.mxu0 %v2020
    %v2088 = vpop.f32.mrf.mxu0
    %v2089 = vadd.f32 %v2016, %v2088
    %2090 = vdwg.mxu0
    %2091 = vmatpush.msra.mxu0 0.0
    %2092 = vmatpush.msra.mxu0 0.0
    %2093 = vmatpush.msra.mxu0 0.0
    %2094 = vmatpush.msra.mxu0 0.0
    %2095 = vmatpush.msra.mxu0 0.0
    %2096 = vmatpush.msra.mxu0 0.0
    %2097 = vmatpush.msra.mxu0 0.0
    %2098 = vmatpush.msra.mxu0 0.0
    %2099 = vmatpush.msra.mxu0 0.0
    %2100 = vmatpush.msra.mxu0 0.0
    %2101 = vmatpush.msra.mxu0 0.0
    %2102 = vmatpush.msra.mxu0 0.0
    %2103 = vmatpush.msra.mxu0 0.0
    %2104 = vmatpush.msra.mxu0 0.0
    %2105 = vmatpush.msra.mxu0 0.0
    %2106 = vmatpush.msra.mxu0 %v2027
    %2107 = vmatmul.f32.gmra.mxu0 %v2020
    %v2108 = vpop.f32.mrf.mxu0
    %v2109 = vadd.f32 %v2016, %v2108
    %2110 = vdwg.mxu0
    %2111 = vmatpush.msra.mxu0 0.0
    %2112 = vmatpush.msra.mxu0 0.0
    %2113 = vmatpush.msra.mxu0 0.0
    %2114 = vmatpush.msra.mxu0 0.0
    %2115 = vmatpush.msra.mxu0 0.0
    %2116 = vmatpush.msra.mxu0 0.0
    %2117 = vmatpush.msra.mxu0 0.0
    %2118 = vmatpush.msra.mxu0 0.0
    %2119 = vmatpush.msra.mxu0 0.0
    %2120 = vmatpush.msra.mxu0 0.0
    %2121 = vmatpush.msra.mxu0 0.0
    %2122 = vmatpush.msra.mxu0 0.0
    %2123 = vmatpush.msra.mxu0 0.0
    %2124 = vmatpush.msra.mxu0 0.0
    %2125 = vmatpush.msra.mxu0 0.0
    %2126 = vmatpush.msra.mxu0 %v2030
    %2127 = vmatmul.f32.gmra.mxu0 %v2020
    %v2128 = vpop.f32.mrf.mxu0
    %v2129 = vadd.f32 %v2016, %v2128
    %2130 = vdwg.mxu0
    %2131 = vmatpush.msra.mxu0 0.0
    %2132 = vmatpush.msra.mxu0 0.0
    %2133 = vmatpush.msra.mxu0 0.0
    %2134 = vmatpush.msra.mxu0 0.0
    %2135 = vmatpush.msra.mxu0 0.0
    %2136 = vmatpush.msra.mxu0 0.0
    %2137 = vmatpush.msra.mxu0 0.0
    %2138 = vmatpush.msra.mxu0 0.0
    %2139 = vmatpush.msra.mxu0 0.0
    %2140 = vmatpush.msra.mxu0 0.0
    %2141 = vmatpush.msra.mxu0 0.0
    %2142 = vmatpush.msra.mxu0 0.0
    %2143 = vmatpush.msra.mxu0 0.0
    %2144 = vmatpush.msra.mxu0 0.0
    %2145 = vmatpush.msra.mxu0 0.0
    %2146 = vmatpush.msra.mxu0 %v2033
    %2147 = vmatmul.f32.gmra.mxu0 %v2020
    %v2148 = vpop.f32.mrf.mxu0
    %v2149 = vadd.f32 %v2016, %v2148
    %2150 = vdwg.mxu0
    %2151 = vmatpush.msra.mxu0 0.0
    %2152 = vmatpush.msra.mxu0 0.0
    %2153 = vmatpush.msra.mxu0 0.0
    %2154 = vmatpush.msra.mxu0 0.0
    %2155 = vmatpush.msra.mxu0 0.0
    %2156 = vmatpush.msra.mxu0 0.0
    %2157 = vmatpush.msra.mxu0 0.0
    %2158 = vmatpush.msra.mxu0 0.0
    %2159 = vmatpush.msra.mxu0 0.0
    %2160 = vmatpush.msra.mxu0 0.0
    %2161 = vmatpush.msra.mxu0 0.0
    %2162 = vmatpush.msra.mxu0 0.0
    %2163 = vmatpush.msra.mxu0 0.0
    %2164 = vmatpush.msra.mxu0 0.0
    %2165 = vmatpush.msra.mxu0 0.0
    %2166 = vmatpush.msra.mxu0 %v2036
    %2167 = vmatmul.f32.gmra.mxu0 %v2020
    %v2168 = vpop.f32.mrf.mxu0
    %v2169 = vadd.f32 %v2016, %v2168
    %2170 = vdwg.mxu0
    %2171 = vmatpush.msra.mxu0 0.0
    %2172 = vmatpush.msra.mxu0 0.0
    %2173 = vmatpush.msra.mxu0 0.0
    %2174 = vmatpush.msra.mxu0 0.0
    %2175 = vmatpush.msra.mxu0 0.0
    %2176 = vmatpush.msra.mxu0 0.0
    %2177 = vmatpush.msra.mxu0 0.0
    %2178 = vmatpush.msra.mxu0 0.0
    %2179 = vmatpush.msra.mxu0 0.0
    %2180 = vmatpush.msra.mxu0 0.0
    %2181 = vmatpush.msra.mxu0 0.0
    %2182 = vmatpush.msra.mxu0 0.0
    %2183 = vmatpush.msra.mxu0 0.0
    %2184 = vmatpush.msra.mxu0 0.0
    %2185 = vmatpush.msra.mxu0 0.0
    %2186 = vmatpush.msra.mxu0 %v2039
    %2187 = vmatmul.f32.gmra.mxu0 %v2020
    %v2188 = vpop.f32.mrf.mxu0
    %v2189 = vadd.f32 %v2016, %v2188
    %2190 = vdwg.mxu0
    %2191 = vmatpush.msra.mxu0 0.0
    %2192 = vmatpush.msra.mxu0 0.0
    %2193 = vmatpush.msra.mxu0 0.0
    %2194 = vmatpush.msra.mxu0 0.0
    %2195 = vmatpush.msra.mxu0 0.0
    %2196 = vmatpush.msra.mxu0 0.0
    %2197 = vmatpush.msra.mxu0 0.0
    %2198 = vmatpush.msra.mxu0 0.0
    %2199 = vmatpush.msra.mxu0 0.0
    %2200 = vmatpush.msra.mxu0 0.0
    %2201 = vmatpush.msra.mxu0 0.0
    %2202 = vmatpush.msra.mxu0 0.0
    %2203 = vmatpush.msra.mxu0 0.0
    %2204 = vmatpush.msra.mxu0 0.0
    %2205 = vmatpush.msra.mxu0 0.0
    %2206 = vmatpush.msra.mxu0 %v2042
    %2207 = vmatmul.f32.gmra.mxu0 %v2020
    %v2208 = vpop.f32.mrf.mxu0
    %v2209 = vadd.f32 %v2016, %v2208
    %2210 = vdwg.mxu0
    %2211 = vmatpush.msra.mxu0 0.0
    %2212 = vmatpush.msra.mxu0 0.0
    %2213 = vmatpush.msra.mxu0 0.0
    %2214 = vmatpush.msra.mxu0 0.0
    %2215 = vmatpush.msra.mxu0 0.0
    %2216 = vmatpush.msra.mxu0 0.0
    %2217 = vmatpush.msra.mxu0 0.0
    %2218 = vmatpush.msra.mxu0 0.0
    %2219 = vmatpush.msra.mxu0 0.0
    %2220 = vmatpush.msra.mxu0 0.0
    %2221 = vmatpush.msra.mxu0 0.0
    %2222 = vmatpush.msra.mxu0 0.0
    %2223 = vmatpush.msra.mxu0 0.0
    %2224 = vmatpush.msra.mxu0 0.0
    %2225 = vmatpush.msra.mxu0 0.0
    %2226 = vmatpush.msra.mxu0 %v2045
    %2227 = vmatmul.f32.gmra.mxu0 %v2020
    %v2228 = vpop.f32.mrf.mxu0
    %v2229 = vadd.f32 %v2016, %v2228
    %2230 = vdwg.mxu0
    %2231 = vmatpush.msra.mxu0 0.0
    %2232 = vmatpush.msra.mxu0 0.0
    %2233 = vmatpush.msra.mxu0 0.0
    %2234 = vmatpush.msra.mxu0 0.0
    %2235 = vmatpush.msra.mxu0 0.0
    %2236 = vmatpush.msra.mxu0 0.0
    %2237 = vmatpush.msra.mxu0 0.0
    %2238 = vmatpush.msra.mxu0 0.0
    %2239 = vmatpush.msra.mxu0 0.0
    %2240 = vmatpush.msra.mxu0 0.0
    %2241 = vmatpush.msra.mxu0 0.0
    %2242 = vmatpush.msra.mxu0 0.0
    %2243 = vmatpush.msra.mxu0 0.0
    %2244 = vmatpush.msra.mxu0 0.0
    %2245 = vmatpush.msra.mxu0 0.0
    %2246 = vmatpush.msra.mxu0 %v2048
    %2247 = vmatmul.f32.gmra.mxu0 %v2020
    %v2248 = vpop.f32.mrf.mxu0
    %v2249 = vadd.f32 %v2016, %v2248
    %2250 = vdwg.mxu0
    %2251 = vmatpush.msra.mxu0 0.0
    %2252 = vmatpush.msra.mxu0 0.0
    %2253 = vmatpush.msra.mxu0 0.0
    %2254 = vmatpush.msra.mxu0 0.0
    %2255 = vmatpush.msra.mxu0 0.0
    %2256 = vmatpush.msra.mxu0 0.0
    %2257 = vmatpush.msra.mxu0 0.0
    %2258 = vmatpush.msra.mxu0 0.0
    %2259 = vmatpush.msra.mxu0 0.0
    %2260 = vmatpush.msra.mxu0 0.0
    %2261 = vmatpush.msra.mxu0 0.0
    %2262 = vmatpush.msra.mxu0 0.0
    %2263 = vmatpush.msra.mxu0 0.0
    %2264 = vmatpush.msra.mxu0 0.0
    %2265 = vmatpush.msra.mxu0 0.0
    %2266 = vmatpush.msra.mxu0 %v2051
    %2267 = vmatmul.f32.gmra.mxu0 %v2020
    %v2268 = vpop.f32.mrf.mxu0
    %v2269 = vadd.f32 %v2016, %v2268
    %2270 = vdwg.mxu0
    %2271 = vmatpush.msra.mxu0 0.0
    %2272 = vmatpush.msra.mxu0 0.0
    %2273 = vmatpush.msra.mxu0 0.0
    %2274 = vmatpush.msra.mxu0 0.0
    %2275 = vmatpush.msra.mxu0 0.0
    %2276 = vmatpush.msra.mxu0 0.0
    %2277 = vmatpush.msra.mxu0 0.0
    %2278 = vmatpush.msra.mxu0 0.0
    %2279 = vmatpush.msra.mxu0 0.0
    %2280 = vmatpush.msra.mxu0 0.0
    %2281 = vmatpush.msra.mxu0 0.0
    %2282 = vmatpush.msra.mxu0 0.0
    %2283 = vmatpush.msra.mxu0 0.0
    %2284 = vmatpush.msra.mxu0 0.0
    %2285 = vmatpush.msra.mxu0 0.0
    %2286 = vmatpush.msra.mxu0 %v2054
    %2287 = vmatmul.f32.gmra.mxu0 %v2020
    %v2288 = vpop.f32.mrf.mxu0
    %v2289 = vadd.f32 %v2016, %v2288
    %2290 = vdwg.mxu0
    %2291 = vmatpush.msra.mxu0 0.0
    %2292 = vmatpush.msra.mxu0 0.0
    %2293 = vmatpush.msra.mxu0 0.0
    %2294 = vmatpush.msra.mxu0 0.0
    %2295 = vmatpush.msra.mxu0 0.0
    %2296 = vmatpush.msra.mxu0 0.0
    %2297 = vmatpush.msra.mxu0 0.0
    %2298 = vmatpush.msra.mxu0 0.0
    %2299 = vmatpush.msra.mxu0 0.0
    %2300 = vmatpush.msra.mxu0 0.0
    %2301 = vmatpush.msra.mxu0 0.0
    %2302 = vmatpush.msra.mxu0 0.0
    %2303 = vmatpush.msra.mxu0 0.0
    %2304 = vmatpush.msra.mxu0 0.0
    %2305 = vmatpush.msra.mxu0 0.0
    %2306 = vmatpush.msra.mxu0 %v2057
    %2307 = vmatmul.f32.gmra.mxu0 %v2020
    %v2308 = vpop.f32.mrf.mxu0
    %v2309 = vadd.f32 %v2016, %v2308
    %2310 = vdwg.mxu0
    %2311 = vmatpush.msra.mxu0 0.0
    %2312 = vmatpush.msra.mxu0 0.0
    %2313 = vmatpush.msra.mxu0 0.0
    %2314 = vmatpush.msra.mxu0 0.0
    %2315 = vmatpush.msra.mxu0 0.0
    %2316 = vmatpush.msra.mxu0 0.0
    %2317 = vmatpush.msra.mxu0 0.0
    %2318 = vmatpush.msra.mxu0 0.0
    %2319 = vmatpush.msra.mxu0 0.0
    %2320 = vmatpush.msra.mxu0 0.0
    %2321 = vmatpush.msra.mxu0 0.0
    %2322 = vmatpush.msra.mxu0 0.0
    %2323 = vmatpush.msra.mxu0 0.0
    %2324 = vmatpush.msra.mxu0 0.0
    %2325 = vmatpush.msra.mxu0 0.0
    %2326 = vmatpush.msra.mxu0 %v2060
    %2327 = vmatmul.f32.gmra.mxu0 %v2020
    %v2328 = vpop.f32.mrf.mxu0
    %v2329 = vadd.f32 %v2016, %v2328
    %2330 = vdwg.mxu0
    %2331 = vmatpush.msra.mxu0 0.0
    %2332 = vmatpush.msra.mxu0 0.0
    %2333 = vmatpush.msra.mxu0 0.0
    %2334 = vmatpush.msra.mxu0 0.0
    %2335 = vmatpush.msra.mxu0 0.0
    %2336 = vmatpush.msra.mxu0 0.0
    %2337 = vmatpush.msra.mxu0 0.0
    %2338 = vmatpush.msra.mxu0 0.0
    %2339 = vmatpush.msra.mxu0 0.0
    %2340 = vmatpush.msra.mxu0 0.0
    %2341 = vmatpush.msra.mxu0 0.0
    %2342 = vmatpush.msra.mxu0 0.0
    %2343 = vmatpush.msra.mxu0 0.0
    %2344 = vmatpush.msra.mxu0 0.0
    %2345 = vmatpush.msra.mxu0 0.0
    %2346 = vmatpush.msra.mxu0 %v2063
    %2347 = vmatmul.f32.gmra.mxu0 %v2020
    %v2348 = vpop.f32.mrf.mxu0
    %v2349 = vadd.f32 %v2016, %v2348
    %2350 = vdwg.mxu0
    %2351 = vmatpush.msra.mxu0 0.0
    %2352 = vmatpush.msra.mxu0 0.0
    %2353 = vmatpush.msra.mxu0 0.0
    %2354 = vmatpush.msra.mxu0 0.0
    %2355 = vmatpush.msra.mxu0 0.0
    %2356 = vmatpush.msra.mxu0 0.0
    %2357 = vmatpush.msra.mxu0 0.0
    %2358 = vmatpush.msra.mxu0 0.0
    %2359 = vmatpush.msra.mxu0 0.0
    %2360 = vmatpush.msra.mxu0 0.0
    %2361 = vmatpush.msra.mxu0 0.0
    %2362 = vmatpush.msra.mxu0 0.0
    %2363 = vmatpush.msra.mxu0 0.0
    %2364 = vmatpush.msra.mxu0 0.0
    %2365 = vmatpush.msra.mxu0 0.0
    %2366 = vmatpush.msra.mxu0 %v2066
    %2367 = vmatmul.f32.gmra.mxu0 %v2020
    %v2368 = vpop.f32.mrf.mxu0
    %v2369 = vadd.f32 %v2016, %v2368
    %2370 = vdwg.mxu0
    %2371 = vmatpush.msra.mxu0 0.0
    %2372 = vmatpush.msra.mxu0 0.0
    %2373 = vmatpush.msra.mxu0 0.0
    %2374 = vmatpush.msra.mxu0 0.0
    %2375 = vmatpush.msra.mxu0 0.0
    %2376 = vmatpush.msra.mxu0 0.0
    %2377 = vmatpush.msra.mxu0 0.0
    %2378 = vmatpush.msra.mxu0 0.0
    %2379 = vmatpush.msra.mxu0 0.0
    %2380 = vmatpush.msra.mxu0 0.0
    %2381 = vmatpush.msra.mxu0 0.0
    %2382 = vmatpush.msra.mxu0 0.0
    %2383 = vmatpush.msra.mxu0 0.0
    %2384 = vmatpush.msra.mxu0 0.0
    %2385 = vmatpush.msra.mxu0 0.0
    %2386 = vmatpush.msra.mxu0 %v2069
    %2387 = vmatmul.f32.gmra.mxu0 %v2020
    %v2388 = vpop.f32.mrf.mxu0
    %v2389 = vadd.f32 %v2016, %v2388
    %2390 = vdwg.mxu0
    %v2391 = vmax.f32 %v2089, -1.0
    %v2392 = vmax.f32 %v2109, -1.0
    %v2393 = vmax.f32 %v2129, -1.0
    %v2394 = vmax.f32 %v2149, -1.0
    %v2395 = vmax.f32 %v2169, -1.0
    %v2396 = vmax.f32 %v2189, -1.0
    %v2397 = vmax.f32 %v2209, -1.0
    %v2398 = vmax.f32 %v2229, -1.0
    %v2399 = vmax.f32 %v2249, -1.0
    %v2400 = vmax.f32 %v2269, -1.0
    %v2401 = vmax.f32 %v2289, -1.0
    %v2402 = vmax.f32 %v2309, -1.0
    %v2403 = vmax.f32 %v2329, -1.0
    %v2404 = vmax.f32 %v2349, -1.0
    %v2405 = vmax.f32 %v2369, -1.0
    %v2406 = vmax.f32 %v2389, -1.0
    %v2407 = vmin.f32 %v2391, 1.0
    %v2408 = vmin.f32 %v2392, 1.0
    %v2409 = vmin.f32 %v2393, 1.0
    %v2410 = vmin.f32 %v2394, 1.0
    %v2411 = vmin.f32 %v2395, 1.0
    %v2412 = vmin.f32 %v2396, 1.0
    %v2413 = vmin.f32 %v2397, 1.0
    %v2414 = vmin.f32 %v2398, 1.0
    %v2415 = vmin.f32 %v2399, 1.0
    %v2416 = vmin.f32 %v2400, 1.0
    %v2417 = vmin.f32 %v2401, 1.0
    %v2418 = vmin.f32 %v2402, 1.0
    %v2419 = vmin.f32 %v2403, 1.0
    %v2420 = vmin.f32 %v2404, 1.0
    %v2421 = vmin.f32 %v2405, 1.0
    %v2422 = vmin.f32 %v2406, 1.0
    %v2423 = vld [vmem:[%s7] sm:$0x1f]
    %v2424 = vld [vmem:[%s8] sm:$0x1f]
    %2426 = vset.pattern.permute.xlu0 0
    %2427 = vperm.xlu0 %2426, %v2424
    %v2428 = vpop.permute.xlu0 %2427
    %v2431 = vsel %vm2018, %v2423, 0
    %v2434 = vsel %vm2022, %v2407, 0
    %v2437 = vsel %vm2022, %v2408, 0
    %v2440 = vsel %vm2022, %v2409, 0
    %v2443 = vsel %vm2022, %v2410, 0
    %v2446 = vsel %vm2022, %v2411, 0
    %v2449 = vsel %vm2022, %v2412, 0
    %v2452 = vsel %vm2022, %v2413, 0
    %v2455 = vsel %vm2022, %v2414, 0
    %v2458 = vsel %vm2022, %v2415, 0
    %v2461 = vsel %vm2022, %v2416, 0
    %v2464 = vsel %vm2022, %v2417, 0
    %v2467 = vsel %vm2022, %v2418, 0
    %v2470 = vsel %vm2022, %v2419, 0
    %v2473 = vsel %vm2022, %v2420, 0
    %v2476 = vsel %vm2022, %v2421, 0
    %v2479 = vsel %vm2022, %v2422, 0
    %2481 = vmatpush.msra.mxu0 0.0
    %2482 = vmatpush.msra.mxu0 0.0
    %2483 = vmatpush.msra.mxu0 0.0
    %2484 = vmatpush.msra.mxu0 0.0
    %2485 = vmatpush.msra.mxu0 0.0
    %2486 = vmatpush.msra.mxu0 0.0
    %2487 = vmatpush.msra.mxu0 0.0
    %2488 = vmatpush.msra.mxu0 0.0
    %2489 = vmatpush.msra.mxu0 0.0
    %2490 = vmatpush.msra.mxu0 0.0
    %2491 = vmatpush.msra.mxu0 0.0
    %2492 = vmatpush.msra.mxu0 0.0
    %2493 = vmatpush.msra.mxu0 0.0
    %2494 = vmatpush.msra.mxu0 0.0
    %2495 = vmatpush.msra.mxu0 0.0
    %2496 = vmatpush.msra.mxu0 %v2434
    %2497 = vmatmul.f32.gmra.mxu0 %v2431
    %v2498 = vpop.f32.mrf.mxu0
    %v2499 = vadd.f32 %v2428, %v2498
    %2500 = vdwg.mxu0
    %2501 = vmatpush.msra.mxu0 0.0
    %2502 = vmatpush.msra.mxu0 0.0
    %2503 = vmatpush.msra.mxu0 0.0
    %2504 = vmatpush.msra.mxu0 0.0
    %2505 = vmatpush.msra.mxu0 0.0
    %2506 = vmatpush.msra.mxu0 0.0
    %2507 = vmatpush.msra.mxu0 0.0
    %2508 = vmatpush.msra.mxu0 0.0
    %2509 = vmatpush.msra.mxu0 0.0
    %2510 = vmatpush.msra.mxu0 0.0
    %2511 = vmatpush.msra.mxu0 0.0
    %2512 = vmatpush.msra.mxu0 0.0
    %2513 = vmatpush.msra.mxu0 0.0
    %2514 = vmatpush.msra.mxu0 0.0
    %2515 = vmatpush.msra.mxu0 0.0
    %2516 = vmatpush.msra.mxu0 %v2437
    %2517 = vmatmul.f32.gmra.mxu0 %v2431
    %v2518 = vpop.f32.mrf.mxu0
    %v2519 = vadd.f32 %v2428, %v2518
    %2520 = vdwg.mxu0
    %2521 = vmatpush.msra.mxu0 0.0
    %2522 = vmatpush.msra.mxu0 0.0
    %2523 = vmatpush.msra.mxu0 0.0
    %2524 = vmatpush.msra.mxu0 0.0
    %2525 = vmatpush.msra.mxu0 0.0
    %2526 = vmatpush.msra.mxu0 0.0
    %2527 = vmatpush.msra.mxu0 0.0
    %2528 = vmatpush.msra.mxu0 0.0
    %2529 = vmatpush.msra.mxu0 0.0
    %2530 = vmatpush.msra.mxu0 0.0
    %2531 = vmatpush.msra.mxu0 0.0
    %2532 = vmatpush.msra.mxu0 0.0
    %2533 = vmatpush.msra.mxu0 0.0
    %2534 = vmatpush.msra.mxu0 0.0
    %2535 = vmatpush.msra.mxu0 0.0
    %2536 = vmatpush.msra.mxu0 %v2440
    %2537 = vmatmul.f32.gmra.mxu0 %v2431
    %v2538 = vpop.f32.mrf.mxu0
    %v2539 = vadd.f32 %v2428, %v2538
    %2540 = vdwg.mxu0
    %2541 = vmatpush.msra.mxu0 0.0
    %2542 = vmatpush.msra.mxu0 0.0
    %2543 = vmatpush.msra.mxu0 0.0
    %2544 = vmatpush.msra.mxu0 0.0
    %2545 = vmatpush.msra.mxu0 0.0
    %2546 = vmatpush.msra.mxu0 0.0
    %2547 = vmatpush.msra.mxu0 0.0
    %2548 = vmatpush.msra.mxu0 0.0
    %2549 = vmatpush.msra.mxu0 0.0
    %2550 = vmatpush.msra.mxu0 0.0
    %2551 = vmatpush.msra.mxu0 0.0
    %2552 = vmatpush.msra.mxu0 0.0
    %2553 = vmatpush.msra.mxu0 0.0
    %2554 = vmatpush.msra.mxu0 0.0
    %2555 = vmatpush.msra.mxu0 0.0
    %2556 = vmatpush.msra.mxu0 %v2443
    %2557 = vmatmul.f32.gmra.mxu0 %v2431
    %v2558 = vpop.f32.mrf.mxu0
    %v2559 = vadd.f32 %v2428, %v2558
    %2560 = vdwg.mxu0
    %2561 = vmatpush.msra.mxu0 0.0
    %2562 = vmatpush.msra.mxu0 0.0
    %2563 = vmatpush.msra.mxu0 0.0
    %2564 = vmatpush.msra.mxu0 0.0
    %2565 = vmatpush.msra.mxu0 0.0
    %2566 = vmatpush.msra.mxu0 0.0
    %2567 = vmatpush.msra.mxu0 0.0
    %2568 = vmatpush.msra.mxu0 0.0
    %2569 = vmatpush.msra.mxu0 0.0
    %2570 = vmatpush.msra.mxu0 0.0
    %2571 = vmatpush.msra.mxu0 0.0
    %2572 = vmatpush.msra.mxu0 0.0
    %2573 = vmatpush.msra.mxu0 0.0
    %2574 = vmatpush.msra.mxu0 0.0
    %2575 = vmatpush.msra.mxu0 0.0
    %2576 = vmatpush.msra.mxu0 %v2446
    %2577 = vmatmul.f32.gmra.mxu0 %v2431
    %v2578 = vpop.f32.mrf.mxu0
    %v2579 = vadd.f32 %v2428, %v2578
    %2580 = vdwg.mxu0
    %2581 = vmatpush.msra.mxu0 0.0
    %2582 = vmatpush.msra.mxu0 0.0
    %2583 = vmatpush.msra.mxu0 0.0
    %2584 = vmatpush.msra.mxu0 0.0
    %2585 = vmatpush.msra.mxu0 0.0
    %2586 = vmatpush.msra.mxu0 0.0
    %2587 = vmatpush.msra.mxu0 0.0
    %2588 = vmatpush.msra.mxu0 0.0
    %2589 = vmatpush.msra.mxu0 0.0
    %2590 = vmatpush.msra.mxu0 0.0
    %2591 = vmatpush.msra.mxu0 0.0
    %2592 = vmatpush.msra.mxu0 0.0
    %2593 = vmatpush.msra.mxu0 0.0
    %2594 = vmatpush.msra.mxu0 0.0
    %2595 = vmatpush.msra.mxu0 0.0
    %2596 = vmatpush.msra.mxu0 %v2449
    %2597 = vmatmul.f32.gmra.mxu0 %v2431
    %v2598 = vpop.f32.mrf.mxu0
    %v2599 = vadd.f32 %v2428, %v2598
    %2600 = vdwg.mxu0
    %2601 = vmatpush.msra.mxu0 0.0
    %2602 = vmatpush.msra.mxu0 0.0
    %2603 = vmatpush.msra.mxu0 0.0
    %2604 = vmatpush.msra.mxu0 0.0
    %2605 = vmatpush.msra.mxu0 0.0
    %2606 = vmatpush.msra.mxu0 0.0
    %2607 = vmatpush.msra.mxu0 0.0
    %2608 = vmatpush.msra.mxu0 0.0
    %2609 = vmatpush.msra.mxu0 0.0
    %2610 = vmatpush.msra.mxu0 0.0
    %2611 = vmatpush.msra.mxu0 0.0
    %2612 = vmatpush.msra.mxu0 0.0
    %2613 = vmatpush.msra.mxu0 0.0
    %2614 = vmatpush.msra.mxu0 0.0
    %2615 = vmatpush.msra.mxu0 0.0
    %2616 = vmatpush.msra.mxu0 %v2452
    %2617 = vmatmul.f32.gmra.mxu0 %v2431
    %v2618 = vpop.f32.mrf.mxu0
    %v2619 = vadd.f32 %v2428, %v2618
    %2620 = vdwg.mxu0
    %2621 = vmatpush.msra.mxu0 0.0
    %2622 = vmatpush.msra.mxu0 0.0
    %2623 = vmatpush.msra.mxu0 0.0
    %2624 = vmatpush.msra.mxu0 0.0
    %2625 = vmatpush.msra.mxu0 0.0
    %2626 = vmatpush.msra.mxu0 0.0
    %2627 = vmatpush.msra.mxu0 0.0
    %2628 = vmatpush.msra.mxu0 0.0
    %2629 = vmatpush.msra.mxu0 0.0
    %2630 = vmatpush.msra.mxu0 0.0
    %2631 = vmatpush.msra.mxu0 0.0
    %2632 = vmatpush.msra.mxu0 0.0
    %2633 = vmatpush.msra.mxu0 0.0
    %2634 = vmatpush.msra.mxu0 0.0
    %2635 = vmatpush.msra.mxu0 0.0
    %2636 = vmatpush.msra.mxu0 %v2455
    %2637 = vmatmul.f32.gmra.mxu0 %v2431
    %v2638 = vpop.f32.mrf.mxu0
    %v2639 = vadd.f32 %v2428, %v2638
    %2640 = vdwg.mxu0
    %2641 = vmatpush.msra.mxu0 0.0
    %2642 = vmatpush.msra.mxu0 0.0
    %2643 = vmatpush.msra.mxu0 0.0
    %2644 = vmatpush.msra.mxu0 0.0
    %2645 = vmatpush.msra.mxu0 0.0
    %2646 = vmatpush.msra.mxu0 0.0
    %2647 = vmatpush.msra.mxu0 0.0
    %2648 = vmatpush.msra.mxu0 0.0
    %2649 = vmatpush.msra.mxu0 0.0
    %2650 = vmatpush.msra.mxu0 0.0
    %2651 = vmatpush.msra.mxu0 0.0
    %2652 = vmatpush.msra.mxu0 0.0
    %2653 = vmatpush.msra.mxu0 0.0
    %2654 = vmatpush.msra.mxu0 0.0
    %2655 = vmatpush.msra.mxu0 0.0
    %2656 = vmatpush.msra.mxu0 %v2458
    %2657 = vmatmul.f32.gmra.mxu0 %v2431
    %v2658 = vpop.f32.mrf.mxu0
    %v2659 = vadd.f32 %v2428, %v2658
    %2660 = vdwg.mxu0
    %2661 = vmatpush.msra.mxu0 0.0
    %2662 = vmatpush.msra.mxu0 0.0
    %2663 = vmatpush.msra.mxu0 0.0
    %2664 = vmatpush.msra.mxu0 0.0
    %2665 = vmatpush.msra.mxu0 0.0
    %2666 = vmatpush.msra.mxu0 0.0
    %2667 = vmatpush.msra.mxu0 0.0
    %2668 = vmatpush.msra.mxu0 0.0
    %2669 = vmatpush.msra.mxu0 0.0
    %2670 = vmatpush.msra.mxu0 0.0
    %2671 = vmatpush.msra.mxu0 0.0
    %2672 = vmatpush.msra.mxu0 0.0
    %2673 = vmatpush.msra.mxu0 0.0
    %2674 = vmatpush.msra.mxu0 0.0
    %2675 = vmatpush.msra.mxu0 0.0
    %2676 = vmatpush.msra.mxu0 %v2461
    %2677 = vmatmul.f32.gmra.mxu0 %v2431
    %v2678 = vpop.f32.mrf.mxu0
    %v2679 = vadd.f32 %v2428, %v2678
    %2680 = vdwg.mxu0
    %2681 = vmatpush.msra.mxu0 0.0
    %2682 = vmatpush.msra.mxu0 0.0
    %2683 = vmatpush.msra.mxu0 0.0
    %2684 = vmatpush.msra.mxu0 0.0
    %2685 = vmatpush.msra.mxu0 0.0
    %2686 = vmatpush.msra.mxu0 0.0
    %2687 = vmatpush.msra.mxu0 0.0
    %2688 = vmatpush.msra.mxu0 0.0
    %2689 = vmatpush.msra.mxu0 0.0
    %2690 = vmatpush.msra.mxu0 0.0
    %2691 = vmatpush.msra.mxu0 0.0
    %2692 = vmatpush.msra.mxu0 0.0
    %2693 = vmatpush.msra.mxu0 0.0
    %2694 = vmatpush.msra.mxu0 0.0
    %2695 = vmatpush.msra.mxu0 0.0
    %2696 = vmatpush.msra.mxu0 %v2464
    %2697 = vmatmul.f32.gmra.mxu0 %v2431
    %v2698 = vpop.f32.mrf.mxu0
    %v2699 = vadd.f32 %v2428, %v2698
    %2700 = vdwg.mxu0
    %2701 = vmatpush.msra.mxu0 0.0
    %2702 = vmatpush.msra.mxu0 0.0
    %2703 = vmatpush.msra.mxu0 0.0
    %2704 = vmatpush.msra.mxu0 0.0
    %2705 = vmatpush.msra.mxu0 0.0
    %2706 = vmatpush.msra.mxu0 0.0
    %2707 = vmatpush.msra.mxu0 0.0
    %2708 = vmatpush.msra.mxu0 0.0
    %2709 = vmatpush.msra.mxu0 0.0
    %2710 = vmatpush.msra.mxu0 0.0
    %2711 = vmatpush.msra.mxu0 0.0
    %2712 = vmatpush.msra.mxu0 0.0
    %2713 = vmatpush.msra.mxu0 0.0
    %2714 = vmatpush.msra.mxu0 0.0
    %2715 = vmatpush.msra.mxu0 0.0
    %2716 = vmatpush.msra.mxu0 %v2467
    %2717 = vmatmul.f32.gmra.mxu0 %v2431
    %v2718 = vpop.f32.mrf.mxu0
    %v2719 = vadd.f32 %v2428, %v2718
    %2720 = vdwg.mxu0
    %2721 = vmatpush.msra.mxu0 0.0
    %2722 = vmatpush.msra.mxu0 0.0
    %2723 = vmatpush.msra.mxu0 0.0
    %2724 = vmatpush.msra.mxu0 0.0
    %2725 = vmatpush.msra.mxu0 0.0
    %2726 = vmatpush.msra.mxu0 0.0
    %2727 = vmatpush.msra.mxu0 0.0
    %2728 = vmatpush.msra.mxu0 0.0
    %2729 = vmatpush.msra.mxu0 0.0
    %2730 = vmatpush.msra.mxu0 0.0
    %2731 = vmatpush.msra.mxu0 0.0
    %2732 = vmatpush.msra.mxu0 0.0
    %2733 = vmatpush.msra.mxu0 0.0
    %2734 = vmatpush.msra.mxu0 0.0
    %2735 = vmatpush.msra.mxu0 0.0
    %2736 = vmatpush.msra.mxu0 %v2470
    %2737 = vmatmul.f32.gmra.mxu0 %v2431
    %v2738 = vpop.f32.mrf.mxu0
    %v2739 = vadd.f32 %v2428, %v2738
    %2740 = vdwg.mxu0
    %2741 = vmatpush.msra.mxu0 0.0
    %2742 = vmatpush.msra.mxu0 0.0
    %2743 = vmatpush.msra.mxu0 0.0
    %2744 = vmatpush.msra.mxu0 0.0
    %2745 = vmatpush.msra.mxu0 0.0
    %2746 = vmatpush.msra.mxu0 0.0
    %2747 = vmatpush.msra.mxu0 0.0
    %2748 = vmatpush.msra.mxu0 0.0
    %2749 = vmatpush.msra.mxu0 0.0
    %2750 = vmatpush.msra.mxu0 0.0
    %2751 = vmatpush.msra.mxu0 0.0
    %2752 = vmatpush.msra.mxu0 0.0
    %2753 = vmatpush.msra.mxu0 0.0
    %2754 = vmatpush.msra.mxu0 0.0
    %2755 = vmatpush.msra.mxu0 0.0
    %2756 = vmatpush.msra.mxu0 %v2473
    %2757 = vmatmul.f32.gmra.mxu0 %v2431
    %v2758 = vpop.f32.mrf.mxu0
    %v2759 = vadd.f32 %v2428, %v2758
    %2760 = vdwg.mxu0
    %2761 = vmatpush.msra.mxu0 0.0
    %2762 = vmatpush.msra.mxu0 0.0
    %2763 = vmatpush.msra.mxu0 0.0
    %2764 = vmatpush.msra.mxu0 0.0
    %2765 = vmatpush.msra.mxu0 0.0
    %2766 = vmatpush.msra.mxu0 0.0
    %2767 = vmatpush.msra.mxu0 0.0
    %2768 = vmatpush.msra.mxu0 0.0
    %2769 = vmatpush.msra.mxu0 0.0
    %2770 = vmatpush.msra.mxu0 0.0
    %2771 = vmatpush.msra.mxu0 0.0
    %2772 = vmatpush.msra.mxu0 0.0
    %2773 = vmatpush.msra.mxu0 0.0
    %2774 = vmatpush.msra.mxu0 0.0
    %2775 = vmatpush.msra.mxu0 0.0
    %2776 = vmatpush.msra.mxu0 %v2476
    %2777 = vmatmul.f32.gmra.mxu0 %v2431
    %v2778 = vpop.f32.mrf.mxu0
    %v2779 = vadd.f32 %v2428, %v2778
    %2780 = vdwg.mxu0
    %2781 = vmatpush.msra.mxu0 0.0
    %2782 = vmatpush.msra.mxu0 0.0
    %2783 = vmatpush.msra.mxu0 0.0
    %2784 = vmatpush.msra.mxu0 0.0
    %2785 = vmatpush.msra.mxu0 0.0
    %2786 = vmatpush.msra.mxu0 0.0
    %2787 = vmatpush.msra.mxu0 0.0
    %2788 = vmatpush.msra.mxu0 0.0
    %2789 = vmatpush.msra.mxu0 0.0
    %2790 = vmatpush.msra.mxu0 0.0
    %2791 = vmatpush.msra.mxu0 0.0
    %2792 = vmatpush.msra.mxu0 0.0
    %2793 = vmatpush.msra.mxu0 0.0
    %2794 = vmatpush.msra.mxu0 0.0
    %2795 = vmatpush.msra.mxu0 0.0
    %2796 = vmatpush.msra.mxu0 %v2479
    %2797 = vmatmul.f32.gmra.mxu0 %v2431
    %v2798 = vpop.f32.mrf.mxu0
    %v2799 = vadd.f32 %v2428, %v2798
    %2800 = vdwg.mxu0
    %2801 = vst [vmem:[#allocation2] sm:$0x1f] %v2499
    %2802 = vst [vmem:[#allocation2 + $0x8] sm:$0x1f] %v2519
    %2803 = vst [vmem:[#allocation2 + $0x10] sm:$0x1f] %v2539
    %2804 = vst [vmem:[#allocation2 + $0x18] sm:$0x1f] %v2559
    %2805 = vst [vmem:[#allocation2 + $0x20] sm:$0x1f] %v2579
    %2806 = vst [vmem:[#allocation2 + $0x28] sm:$0x1f] %v2599
    %2807 = vst [vmem:[#allocation2 + $0x30] sm:$0x1f] %v2619
    %2808 = vst [vmem:[#allocation2 + $0x38] sm:$0x1f] %v2639
    %2809 = vst [vmem:[#allocation2 + $0x40] sm:$0x1f] %v2659
    %2810 = vst [vmem:[#allocation2 + $0x48] sm:$0x1f] %v2679
    %2811 = vst [vmem:[#allocation2 + $0x50] sm:$0x1f] %v2699
    %2812 = vst [vmem:[#allocation2 + $0x58] sm:$0x1f] %v2719
    %2813 = vst [vmem:[#allocation2 + $0x60] sm:$0x1f] %v2739
    %2814 = vst [vmem:[#allocation2 + $0x68] sm:$0x1f] %v2759
    %2815 = vst [vmem:[#allocation2 + $0x70] sm:$0x1f] %v2779
    %2816 = vst [vmem:[#allocation2 + $0x78] sm:$0x1f] %v2799
    // Predicated region
    $region38: #{net1_forward.1} parent=1 // pred_check
      _
    $region39: #{net1_forward.1} parent=1 // pred_check_branch
      %2818 = sbr.rel (0) target = $region41
    $region40: #{net1_forward.1} parent=1 // pred_region
      %2820 = vsyncadd [#allocation3], 0
      %s2822 = sshll.u32 [#allocation2], 4
      %s2823 = int_to_ptr.vmem [resolvable:$true] %s2822
      %s2824 = sshll.u32 %s9, 4
      %s2825 = int_to_ptr.hbm [resolvable:$true] %s2824
      %2827 = dma.vmem_to_hbm [thread:$0]  %s2823, 2048, %s2825, [#allocation3]
    $region41: #{net1_forward.1} parent=1 // pred_fallthru
      _
    // Predicated region
    $region42: #{net1_forward.1} parent=1 // pred_check
      _
    $region43: #{net1_forward.1} parent=1 // pred_check_branch
      %2829 = sbr.rel (0) target = $region45
    $region44: #{net1_forward.1} parent=1 // pred_region
      %2831 = dma.done [#allocation3], 2048
    $region45: #{net1_forward.1} parent=1 // pred_fallthru
      _
    %2832 = vsyncpa [#allocation3], 1

</llo_original>
